<compile_context>
chip_gen: v7x
topology: tpu7x:2x2x1
jax: 0.10.0
libtpu: 0.0.40
codegen_flags: <defaults>
</compile_context>

<pallas_src>
import jax
import jax.numpy as jnp
from jax.experimental import pallas as pl
from jax.experimental.pallas import tpu as pltpu

HIDDEN_DIM = 128
HIDDEN_LAYERS = 6
IN_DIM = 8
OUT_DIM = 4
OUT_PAD = 8            # output feature rows padded 4 -> 8 (f32 sublane tile)
MAX_TILE_N = 2048      # max batch (lane) tile per grid step


def dqnet_kernel(x_ref, w1t_ref, b1_ref, wht_ref, bht_ref, wlt_ref, blt_ref, o_ref):
    """Transposed-layout MLP: features on sublanes, batch on lanes.

    x_ref   : (8,  TILE_N)  f32   one batch tile (batch on lane axis)
    w1t_ref : (128, 8)      f32   W1^T (resident)
    b1_ref  : (128, 1)      f32
    wht_ref : (6, 128, 128) bf16  per-layer Wh^T (resident)
    bht_ref : (6, 128, 1)   f32
    wlt_ref : (8, 128)      f32   Wl^T zero-padded 4 -> 8 rows (resident)
    blt_ref : (8, 1)        f32
    o_ref   : (8, TILE_N)   f32
    """
    # first layer: h = W1^T @ x + b1   (K = 8, tiny f32 MXU pass)
    h = jnp.dot(w1t_ref[...], x_ref[...],
                preferred_element_type=jnp.float32) + b1_ref[...]

    # hidden stack: 6 x (Linear(128->128) + ReLU), static unroll.
    # bf16 MXU inputs, f32 accumulation; bias add / ReLU stay in f32.
    for i in range(HIDDEN_LAYERS):
        h = jnp.dot(wht_ref[i], h.astype(jnp.bfloat16),
                    preferred_element_type=jnp.float32) + bht_ref[i]
        h = jnp.maximum(h, 0.0)

    # last layer: Linear(128->4) padded to 8 output rows (rows 4..7 are zero)
    o_ref[...] = (jnp.dot(wlt_ref[...], h,
                          preferred_element_type=jnp.float32)
                  + blt_ref[...]).astype(o_ref.dtype)


def dqnet_forward(x, params):
    """x: [batch, 8] float32. Returns [batch, 4] float32."""
    w1, b1, wh, bh, wl, bl = params
    batch = x.shape[0]

    # ---- batch (lane) tiling: tiles are multiples of 128 lanes, grid >= 2 ----
    base = max(256, ((batch + 255) // 256) * 256)
    num_tiles = max(2, (base + MAX_TILE_N - 1) // MAX_TILE_N)
    tile_n = ((base // 128 + num_tiles - 1) // num_tiles) * 128
    padded_batch = tile_n * num_tiles

    # ---- layout plumbing: batch -> lanes, features -> sublanes (all tiny) ----
    xp = jnp.zeros((IN_DIM, padded_batch), jnp.float32).at[:, :batch].set(x.T)
    w1t = w1.T.astype(jnp.float32)                                   # (128, 8)
    b1c = b1.reshape(HIDDEN_DIM, 1).astype(jnp.float32)              # (128, 1)
    wht = jnp.transpose(wh, (0, 2, 1)).astype(jnp.bfloat16)          # (6,128,128)
    bhc = bh.reshape(HIDDEN_LAYERS, HIDDEN_DIM, 1).astype(jnp.float32)
    wlt = jnp.zeros((OUT_PAD, HIDDEN_DIM), jnp.float32).at[:OUT_DIM, :].set(
        wl.T.astype(jnp.float32))
    blc = jnp.zeros((OUT_PAD, 1), jnp.float32).at[:OUT_DIM, :].set(
        bl.reshape(OUT_DIM, 1).astype(jnp.float32))

    # weights/biases: constant index_map -> stay VMEM-resident across steps
    def resident(shape):
        return pl.BlockSpec(shape, lambda i, n=len(shape): (0,) * n)

    flops = 2 * padded_batch * (IN_DIM * HIDDEN_DIM
                                + HIDDEN_LAYERS * HIDDEN_DIM * HIDDEN_DIM
                                + HIDDEN_DIM * OUT_PAD)
    bytes_accessed = (xp.size * 4 + w1t.size * 4 + b1c.size * 4
                      + wht.size * 2 + bhc.size * 4
                      + wlt.size * 4 + blc.size * 4
                      + OUT_PAD * padded_batch * 4)

    out = pl.pallas_call(
        dqnet_kernel,
        out_shape=jax.ShapeDtypeStruct((OUT_PAD, padded_batch), jnp.float32),
        grid=(num_tiles,),
        in_specs=[
            pl.BlockSpec((IN_DIM, tile_n), lambda i: (0, i)),       # x tile
            resident((HIDDEN_DIM, IN_DIM)),                          # W1^T
            resident((HIDDEN_DIM, 1)),                               # b1
            resident((HIDDEN_LAYERS, HIDDEN_DIM, HIDDEN_DIM)),       # Wh^T stack
            resident((HIDDEN_LAYERS, HIDDEN_DIM, 1)),                # bh stack
            resident((OUT_PAD, HIDDEN_DIM)),                         # Wl^T (pad)
            resident((OUT_PAD, 1)),                                  # bl (pad)
        ],
        out_specs=pl.BlockSpec((OUT_PAD, tile_n), lambda i: (0, i)),
        compiler_params=pltpu.CompilerParams(
            dimension_semantics=("parallel",),
            vmem_limit_bytes=32 * 1024 * 1024,
        ),
        cost_estimate=pl.CostEstimate(flops=flops, transcendentals=0,
                                      bytes_accessed=bytes_accessed),
    )(xp, w1t, b1c, wht, bhc, wlt, blc)

    # tiny slice of an (8, padded_batch) slab, back to row-major [batch, 4]
    return out[:OUT_DIM, :batch].T


def init_params(key):
    """Deterministic init mimicking nn.Linear default (U[-1/sqrt(fan_in), +])."""
    ks = jax.random.split(key, 6)

    def uniform(k, shape, fan_in):
        bound = 1.0 / jnp.sqrt(jnp.float32(fan_in))
        return jax.random.uniform(k, shape, jnp.float32, -bound, bound)

    w1 = uniform(ks[0], (IN_DIM, HIDDEN_DIM), IN_DIM)
    b1 = uniform(ks[1], (1, HIDDEN_DIM), IN_DIM)
    wh = uniform(ks[2], (HIDDEN_LAYERS, HIDDEN_DIM, HIDDEN_DIM), HIDDEN_DIM)
    bh = uniform(ks[3], (HIDDEN_LAYERS, 1, HIDDEN_DIM), HIDDEN_DIM)
    wl = uniform(ks[4], (HIDDEN_DIM, OUT_DIM), HIDDEN_DIM)
    bl = uniform(ks[5], (1, OUT_DIM), HIDDEN_DIM)
    return w1, b1, wh, bh, wl, bl


def reference_forward_mixed(x, params):
    """Plain-JAX reference with the same precision policy as the kernel."""
    w1, b1, wh, bh, wl, bl = params
    h = jnp.dot(x, w1, preferred_element_type=jnp.float32) + b1          # f32
    for i in range(HIDDEN_LAYERS):
        h = jnp.dot(h.astype(jnp.bfloat16), wh[i].astype(jnp.bfloat16),
                    preferred_element_type=jnp.float32) + bh[i]          # bf16 MXU
        h = jnp.maximum(h, 0.0)
    return jnp.dot(h, wl, preferred_element_type=jnp.float32) + bl       # f32


def reference_forward_f32(x, params):
    """Full-precision reference (loose-tolerance sanity check)."""
    w1, b1, wh, bh, wl, bl = params
    h = x @ w1 + b1
    for i in range(HIDDEN_LAYERS):
        h = jnp.maximum(h @ wh[i] + bh[i], 0.0)
    return h @ wl + bl


if __name__ == "__main__":
    key = jax.random.PRNGKey(0)
    pkey, xkey = jax.random.split(key)

    params = init_params(pkey)
    batch = 70  # exercises batch padding (70 -> 256, grid=2) and the [:4,:batch] slice
    x = jax.random.normal(xkey, (batch, IN_DIM), jnp.float32)

    fwd = jax.jit(dqnet_forward)
    out = jax.block_until_ready(fwd(x, params))
    assert out.shape == (batch, OUT_DIM)

    ref_mixed = reference_forward_mixed(x, params)
    ref_f32 = reference_forward_f32(x, params)
    assert jnp.allclose(out, ref_mixed, atol=2e-3, rtol=2e-3), "mismatch vs mixed ref"
    assert jnp.allclose(out, ref_f32, atol=5e-2, rtol=5e-2), "mismatch vs f32 ref"

    print("KERNEL_OK")
</pallas_src>

<mosaic_0001>
module attributes {stable_mosaic.version = 11 : i64} {
  func.func @dqnet_kernel(%arg0: i32, %arg1: memref<8x128xf32, #tpu.memory_space<vmem>>, %arg2: memref<128x8xf32, #tpu.memory_space<vmem>>, %arg3: memref<128x1xf32, #tpu.memory_space<vmem>>, %arg4: memref<6x128x128xbf16, #tpu.memory_space<vmem>>, %arg5: memref<6x128x1xf32, #tpu.memory_space<vmem>>, %arg6: memref<8x128xf32, #tpu.memory_space<vmem>>, %arg7: memref<8x1xf32, #tpu.memory_space<vmem>>, %arg8: memref<8x128xf32, #tpu.memory_space<vmem>>) attributes {dimension_semantics = [#tpu.dimension_semantics<parallel>], iteration_bounds = array<i64: 2>, scalar_prefetch = 0 : i64, scratch_operands = 0 : i64, tpu.core_type = #tpu.core_type<tc>, window_params = [{transform_indices = @transform_0, window_bounds = array<i64: 8, 128>}, {pipeline_mode = #tpu.pipeline_mode<synchronous>, transform_indices = @transform_1, window_bounds = array<i64: 128, 8>}, {pipeline_mode = #tpu.pipeline_mode<synchronous>, transform_indices = @transform_2, window_bounds = array<i64: 128, 1>}, {pipeline_mode = #tpu.pipeline_mode<synchronous>, transform_indices = @transform_3, window_bounds = array<i64: 6, 128, 128>}, {pipeline_mode = #tpu.pipeline_mode<synchronous>, transform_indices = @transform_4, window_bounds = array<i64: 6, 128, 1>}, {pipeline_mode = #tpu.pipeline_mode<synchronous>, transform_indices = @transform_5, window_bounds = array<i64: 8, 128>}, {pipeline_mode = #tpu.pipeline_mode<synchronous>, transform_indices = @transform_6, window_bounds = array<i64: 8, 1>}, {transform_indices = @transform_7, window_bounds = array<i64: 8, 128>}]} {
    %c0 = arith.constant 0 : index
    %c0_0 = arith.constant 0 : index
    %0 = vector.load %arg2[%c0, %c0_0] : memref<128x8xf32, #tpu.memory_space<vmem>>, vector<128x8xf32>
    %c0_1 = arith.constant 0 : index
    %c0_2 = arith.constant 0 : index
    %1 = vector.load %arg1[%c0_1, %c0_2] : memref<8x128xf32, #tpu.memory_space<vmem>>, vector<8x128xf32>
    %cst = arith.constant dense<0.000000e+00> : vector<128x128xf32>
    %2 = tpu.matmul %0, %1, %cst {dimension_numbers = #tpu.dot_dimension_numbers<[1], [0], [0], [1], [0, 0, 1, 1], [], []>} : vector<128x8xf32>, vector<8x128xf32>, vector<128x128xf32> -> vector<128x128xf32>
    %c0_3 = arith.constant 0 : index
    %c0_4 = arith.constant 0 : index
    %3 = vector.load %arg3[%c0_3, %c0_4] : memref<128x1xf32, #tpu.memory_space<vmem>>, vector<128x1xf32>
    %4 = vector.broadcast %3 : vector<128x1xf32> to vector<128x128xf32>
    %5 = arith.addf %2, %4 : vector<128x128xf32>
    %c0_5 = arith.constant 0 : index
    %c0_6 = arith.constant 0 : index
    %c0_7 = arith.constant 0 : index
    %6 = vector.load %arg4[%c0_5, %c0_6, %c0_7] : memref<6x128x128xbf16, #tpu.memory_space<vmem>>, vector<1x128x128xbf16>
    %7 = vector.shape_cast %6 : vector<1x128x128xbf16> to vector<128x128xbf16>
    %8 = arith.truncf %5 : vector<128x128xf32> to vector<128x128xbf16>
    %cst_8 = arith.constant dense<0.000000e+00> : vector<128x128xf32>
    %9 = tpu.matmul %7, %8, %cst_8 {dimension_numbers = #tpu.dot_dimension_numbers<[1], [0], [0], [1], [0, 0, 1, 1], [], []>} : vector<128x128xbf16>, vector<128x128xbf16>, vector<128x128xf32> -> vector<128x128xf32>
    %c0_9 = arith.constant 0 : index
    %c0_10 = arith.constant 0 : index
    %c0_11 = arith.constant 0 : index
    %10 = vector.load %arg5[%c0_9, %c0_10, %c0_11] : memref<6x128x1xf32, #tpu.memory_space<vmem>>, vector<1x128x1xf32>
    %11 = vector.shape_cast %10 : vector<1x128x1xf32> to vector<128x1xf32>
    %12 = vector.broadcast %11 : vector<128x1xf32> to vector<128x128xf32>
    %13 = arith.addf %9, %12 : vector<128x128xf32>
    %cst_12 = arith.constant 0.000000e+00 : f32
    %14 = vector.broadcast %cst_12 : f32 to vector<128x128xf32>
    %15 = arith.maximumf %13, %14 : vector<128x128xf32>
    %c1 = arith.constant 1 : index
    %c0_13 = arith.constant 0 : index
    %c0_14 = arith.constant 0 : index
    %16 = vector.load %arg4[%c1, %c0_13, %c0_14] : memref<6x128x128xbf16, #tpu.memory_space<vmem>>, vector<1x128x128xbf16>
    %17 = vector.shape_cast %16 : vector<1x128x128xbf16> to vector<128x128xbf16>
    %18 = arith.truncf %15 : vector<128x128xf32> to vector<128x128xbf16>
    %cst_15 = arith.constant dense<0.000000e+00> : vector<128x128xf32>
    %19 = tpu.matmul %17, %18, %cst_15 {dimension_numbers = #tpu.dot_dimension_numbers<[1], [0], [0], [1], [0, 0, 1, 1], [], []>} : vector<128x128xbf16>, vector<128x128xbf16>, vector<128x128xf32> -> vector<128x128xf32>
    %c1_16 = arith.constant 1 : index
    %c0_17 = arith.constant 0 : index
    %c0_18 = arith.constant 0 : index
    %20 = vector.load %arg5[%c1_16, %c0_17, %c0_18] : memref<6x128x1xf32, #tpu.memory_space<vmem>>, vector<1x128x1xf32>
    %21 = vector.shape_cast %20 : vector<1x128x1xf32> to vector<128x1xf32>
    %22 = vector.broadcast %21 : vector<128x1xf32> to vector<128x128xf32>
    %23 = arith.addf %19, %22 : vector<128x128xf32>
    %cst_19 = arith.constant 0.000000e+00 : f32
    %24 = vector.broadcast %cst_19 : f32 to vector<128x128xf32>
    %25 = arith.maximumf %23, %24 : vector<128x128xf32>
    %c2 = arith.constant 2 : index
    %c0_20 = arith.constant 0 : index
    %c0_21 = arith.constant 0 : index
    %26 = vector.load %arg4[%c2, %c0_20, %c0_21] : memref<6x128x128xbf16, #tpu.memory_space<vmem>>, vector<1x128x128xbf16>
    %27 = vector.shape_cast %26 : vector<1x128x128xbf16> to vector<128x128xbf16>
    %28 = arith.truncf %25 : vector<128x128xf32> to vector<128x128xbf16>
    %cst_22 = arith.constant dense<0.000000e+00> : vector<128x128xf32>
    %29 = tpu.matmul %27, %28, %cst_22 {dimension_numbers = #tpu.dot_dimension_numbers<[1], [0], [0], [1], [0, 0, 1, 1], [], []>} : vector<128x128xbf16>, vector<128x128xbf16>, vector<128x128xf32> -> vector<128x128xf32>
    %c2_23 = arith.constant 2 : index
    %c0_24 = arith.constant 0 : index
    %c0_25 = arith.constant 0 : index
    %30 = vector.load %arg5[%c2_23, %c0_24, %c0_25] : memref<6x128x1xf32, #tpu.memory_space<vmem>>, vector<1x128x1xf32>
    %31 = vector.shape_cast %30 : vector<1x128x1xf32> to vector<128x1xf32>
    %32 = vector.broadcast %31 : vector<128x1xf32> to vector<128x128xf32>
    %33 = arith.addf %29, %32 : vector<128x128xf32>
    %cst_26 = arith.constant 0.000000e+00 : f32
    %34 = vector.broadcast %cst_26 : f32 to vector<128x128xf32>
    %35 = arith.maximumf %33, %34 : vector<128x128xf32>
    %c3 = arith.constant 3 : index
    %c0_27 = arith.constant 0 : index
    %c0_28 = arith.constant 0 : index
    %36 = vector.load %arg4[%c3, %c0_27, %c0_28] : memref<6x128x128xbf16, #tpu.memory_space<vmem>>, vector<1x128x128xbf16>
    %37 = vector.shape_cast %36 : vector<1x128x128xbf16> to vector<128x128xbf16>
    %38 = arith.truncf %35 : vector<128x128xf32> to vector<128x128xbf16>
    %cst_29 = arith.constant dense<0.000000e+00> : vector<128x128xf32>
    %39 = tpu.matmul %37, %38, %cst_29 {dimension_numbers = #tpu.dot_dimension_numbers<[1], [0], [0], [1], [0, 0, 1, 1], [], []>} : vector<128x128xbf16>, vector<128x128xbf16>, vector<128x128xf32> -> vector<128x128xf32>
    %c3_30 = arith.constant 3 : index
    %c0_31 = arith.constant 0 : index
    %c0_32 = arith.constant 0 : index
    %40 = vector.load %arg5[%c3_30, %c0_31, %c0_32] : memref<6x128x1xf32, #tpu.memory_space<vmem>>, vector<1x128x1xf32>
    %41 = vector.shape_cast %40 : vector<1x128x1xf32> to vector<128x1xf32>
    %42 = vector.broadcast %41 : vector<128x1xf32> to vector<128x128xf32>
    %43 = arith.addf %39, %42 : vector<128x128xf32>
    %cst_33 = arith.constant 0.000000e+00 : f32
    %44 = vector.broadcast %cst_33 : f32 to vector<128x128xf32>
    %45 = arith.maximumf %43, %44 : vector<128x128xf32>
    %c4 = arith.constant 4 : index
    %c0_34 = arith.constant 0 : index
    %c0_35 = arith.constant 0 : index
    %46 = vector.load %arg4[%c4, %c0_34, %c0_35] : memref<6x128x128xbf16, #tpu.memory_space<vmem>>, vector<1x128x128xbf16>
    %47 = vector.shape_cast %46 : vector<1x128x128xbf16> to vector<128x128xbf16>
    %48 = arith.truncf %45 : vector<128x128xf32> to vector<128x128xbf16>
    %cst_36 = arith.constant dense<0.000000e+00> : vector<128x128xf32>
    %49 = tpu.matmul %47, %48, %cst_36 {dimension_numbers = #tpu.dot_dimension_numbers<[1], [0], [0], [1], [0, 0, 1, 1], [], []>} : vector<128x128xbf16>, vector<128x128xbf16>, vector<128x128xf32> -> vector<128x128xf32>
    %c4_37 = arith.constant 4 : index
    %c0_38 = arith.constant 0 : index
    %c0_39 = arith.constant 0 : index
    %50 = vector.load %arg5[%c4_37, %c0_38, %c0_39] : memref<6x128x1xf32, #tpu.memory_space<vmem>>, vector<1x128x1xf32>
    %51 = vector.shape_cast %50 : vector<1x128x1xf32> to vector<128x1xf32>
    %52 = vector.broadcast %51 : vector<128x1xf32> to vector<128x128xf32>
    %53 = arith.addf %49, %52 : vector<128x128xf32>
    %cst_40 = arith.constant 0.000000e+00 : f32
    %54 = vector.broadcast %cst_40 : f32 to vector<128x128xf32>
    %55 = arith.maximumf %53, %54 : vector<128x128xf32>
    %c5 = arith.constant 5 : index
    %c0_41 = arith.constant 0 : index
    %c0_42 = arith.constant 0 : index
    %56 = vector.load %arg4[%c5, %c0_41, %c0_42] : memref<6x128x128xbf16, #tpu.memory_space<vmem>>, vector<1x128x128xbf16>
    %57 = vector.shape_cast %56 : vector<1x128x128xbf16> to vector<128x128xbf16>
    %58 = arith.truncf %55 : vector<128x128xf32> to vector<128x128xbf16>
    %cst_43 = arith.constant dense<0.000000e+00> : vector<128x128xf32>
    %59 = tpu.matmul %57, %58, %cst_43 {dimension_numbers = #tpu.dot_dimension_numbers<[1], [0], [0], [1], [0, 0, 1, 1], [], []>} : vector<128x128xbf16>, vector<128x128xbf16>, vector<128x128xf32> -> vector<128x128xf32>
    %c5_44 = arith.constant 5 : index
    %c0_45 = arith.constant 0 : index
    %c0_46 = arith.constant 0 : index
    %60 = vector.load %arg5[%c5_44, %c0_45, %c0_46] : memref<6x128x1xf32, #tpu.memory_space<vmem>>, vector<1x128x1xf32>
    %61 = vector.shape_cast %60 : vector<1x128x1xf32> to vector<128x1xf32>
    %62 = vector.broadcast %61 : vector<128x1xf32> to vector<128x128xf32>
    %63 = arith.addf %59, %62 : vector<128x128xf32>
    %cst_47 = arith.constant 0.000000e+00 : f32
    %64 = vector.broadcast %cst_47 : f32 to vector<128x128xf32>
    %65 = arith.maximumf %63, %64 : vector<128x128xf32>
    %c0_48 = arith.constant 0 : index
    %c0_49 = arith.constant 0 : index
    %66 = vector.load %arg6[%c0_48, %c0_49] : memref<8x128xf32, #tpu.memory_space<vmem>>, vector<8x128xf32>
    %cst_50 = arith.constant dense<0.000000e+00> : vector<8x128xf32>
    %67 = tpu.matmul %66, %65, %cst_50 {dimension_numbers = #tpu.dot_dimension_numbers<[1], [0], [0], [1], [0, 0, 1, 1], [], []>} : vector<8x128xf32>, vector<128x128xf32>, vector<8x128xf32> -> vector<8x128xf32>
    %c0_51 = arith.constant 0 : index
    %c0_52 = arith.constant 0 : index
    %68 = vector.load %arg7[%c0_51, %c0_52] : memref<8x1xf32, #tpu.memory_space<vmem>>, vector<8x1xf32>
    %69 = vector.broadcast %68 : vector<8x1xf32> to vector<8x128xf32>
    %70 = arith.addf %67, %69 : vector<8x128xf32>
    %c0_53 = arith.constant 0 : index
    %c0_54 = arith.constant 0 : index
    %71 = vector.load %arg8[%c0_53, %c0_54] : memref<8x128xf32, #tpu.memory_space<vmem>>, vector<8x128xf32>
    tpu.vector_store %arg8[%c0_53, %c0_54], %70 {strides = array<i32>} : memref<8x128xf32, #tpu.memory_space<vmem>>, vector<8x128xf32>,
    return
  }
  func.func @transform_0(%arg0: i32) -> (i32, i32) {
    %c0_i32 = arith.constant 0 : i32
    %c0_i32_0 = arith.constant 0 : i32
    return %c0_i32, %arg0 : i32, i32
  }
  func.func @transform_1(%arg0: i32) -> (i32, i32) {
    %c0_i32 = arith.constant 0 : i32
    %c0_i32_0 = arith.constant 0 : i32
    %c0_i32_1 = arith.constant 0 : i32
    return %c0_i32, %c0_i32_0 : i32, i32
  }
  func.func @transform_2(%arg0: i32) -> (i32, i32) {
    %c0_i32 = arith.constant 0 : i32
    %c0_i32_0 = arith.constant 0 : i32
    %c0_i32_1 = arith.constant 0 : i32
    return %c0_i32, %c0_i32_0 : i32, i32
  }
  func.func @transform_3(%arg0: i32) -> (i32, i32, i32) {
    %c0_i32 = arith.constant 0 : i32
    %c0_i32_0 = arith.constant 0 : i32
    %c0_i32_1 = arith.constant 0 : i32
    %c0_i32_2 = arith.constant 0 : i32
    return %c0_i32, %c0_i32_0, %c0_i32_1 : i32, i32, i32
  }
  func.func @transform_4(%arg0: i32) -> (i32, i32, i32) {
    %c0_i32 = arith.constant 0 : i32
    %c0_i32_0 = arith.constant 0 : i32
    %c0_i32_1 = arith.constant 0 : i32
    %c0_i32_2 = arith.constant 0 : i32
    return %c0_i32, %c0_i32_0, %c0_i32_1 : i32, i32, i32
  }
  func.func @transform_5(%arg0: i32) -> (i32, i32) {
    %c0_i32 = arith.constant 0 : i32
    %c0_i32_0 = arith.constant 0 : i32
    %c0_i32_1 = arith.constant 0 : i32
    return %c0_i32, %c0_i32_0 : i32, i32
  }
  func.func @transform_6(%arg0: i32) -> (i32, i32) {
    %c0_i32 = arith.constant 0 : i32
    %c0_i32_0 = arith.constant 0 : i32
    %c0_i32_1 = arith.constant 0 : i32
    return %c0_i32, %c0_i32_0 : i32, i32
  }
  func.func @transform_7(%arg0: i32) -> (i32, i32) {
    %c0_i32 = arith.constant 0 : i32
    %c0_i32_0 = arith.constant 0 : i32
    return %c0_i32, %arg0 : i32, i32
  }
}

</mosaic_0001>

<llo_original>
// kernel: dqnet_forward.1
$region0: #{dqnet_forward.1}
  #allocation0 [shape = 'u32[]', space=smem, size = 0x4, offset = 0x4, fixed_abs, tag = 'smem constant byte address 0x4 - core index']
  #allocation1 [shape = 'u32[144,128]{1,0:T(1,128)}', space=vmem, size = 0x12000, scoped, tag = 'internal scratch']
  %s0 = inlined_call_operand.vmem [shape: f32[8,256], index: 0, kind: input, shape index: {}]
  %s1 = inlined_call_operand.vmem [shape: f32[128,8], index: 1, kind: input, shape index: {}]
  %s2 = inlined_call_operand.vmem [shape: f32[128,1], index: 2, kind: input, shape index: {}]
  %s3 = inlined_call_operand.vmem [shape: bf16[6,128,128], index: 3, kind: input, shape index: {}]
  %s4 = inlined_call_operand.vmem [shape: f32[6,128,1], index: 4, kind: input, shape index: {}]
  %s5 = inlined_call_operand.vmem [shape: f32[8,128], index: 5, kind: input, shape index: {}]
  %s6 = inlined_call_operand.vmem [shape: f32[8,1], index: 6, kind: input, shape index: {}]
  %s7 = inlined_call_operand.vmem [shape: f32[8,256], index: 7, kind: output, shape index: {}]
  %s8 = sld [smem:[#allocation0]]
  $region61: #{dqnet_forward.1} parent=0
    _
  %s10 = ssub.s32 1, %s8
  %s11 = scalar_select 0, %s10, %s8
  loop: start=0, step=1, limit=4
  $region2: #{dqnet_forward.1} parent=0 // loop_pre_header
    _
  $region3: #{dqnet_forward.1} parent=0 // loop_header
    %s13 = sphi 0, %s17
    %p14 = scmp.ge.s32.totalorder %s13, 4
    %s23 = sphi 0, %s25
    %s26 = sphi 0, %s23
    %s27 = sphi 0, %s26
    %s43 = sphi 0, %s27
    %s47 = sphi 0, %s47
    %s49 = sphi 0, %s47
    %s50 = sphi 0, %s49
    %s64 = sphi 0, %s50
    %s68 = sphi 0, %s68
    %s70 = sphi 0, %s68
    %s71 = sphi 0, %s70
    %s85 = sphi 0, %s71
    %s89 = sphi 0, %s89
    %s91 = sphi 0, %s89
    %s92 = sphi 0, %s91
    %s106 = sphi 0, %s92
    %s110 = sphi 0, %s110
    %s112 = sphi 0, %s110
    %s113 = sphi 0, %s112
    %s127 = sphi 0, %s113
    %s131 = sphi 0, %s131
    %s133 = sphi 0, %s131
    %s134 = sphi 0, %s133
    %s148 = sphi 0, %s134
    %s152 = sphi 0, %s152
    %s154 = sphi 0, %s152
    %s155 = sphi 0, %s154
    %s169 = sphi 0, %s155
    %s175 = sphi 0, %s177
    %s178 = sphi 0, %s175
    %s179 = sphi 0, %s178
    %s195 = sphi 0, %s179
  $region4: #{dqnet_forward.1} parent=0 // loop_header_branch
    %16 = sbr.rel (%p14) target = $region8
  $region5: #{dqnet_forward.1} parent=0 // loop_body
    %s18 = ssub.s32 %s13, 1
    %s19 = ssub.s32 %s13, 2
    %s20 = sadd.s32 %s13, 1
    %s21 = ssub.s32 %s13, %s20
    %p22 = scmp.eq.s32.totalorder %s21, 0
    %s24 = sadd.s32 %s23, 1
    %s25 = scalar_select %p22, %s23, %s24
    %p28 = pneg %p22
    %p29 = scmp.eq.s32.totalorder %s13, 1
    %p30 = por %p28, %p29
    %p31 = scmp.ne.s32.totalorder %s23, %s26
    %p32 = scmp.eq.s32.totalorder %s13, 0
    %p33 = por %p31, %p32
    %p34 = scmp.ne.s32.totalorder %s23, %s26
    %p35 = scmp.eq.s32.totalorder %s18, 1
    %p36 = por %p34, %p35
    %p37 = scmp.ne.s32.totalorder %s26, %s27
    %p38 = scmp.eq.s32.totalorder %s18, 0
    %p39 = por %p37, %p38
    %p40 = scmp.ne.s32.totalorder %s26, %s27
    %p41 = scmp.eq.s32.totalorder %s19, 1
    %p42 = por %p40, %p41
    %p44 = scmp.ne.s32.totalorder %s27, %s43
    %p45 = scmp.eq.s32.totalorder %s19, 0
    %p46 = por %p44, %p45
    %s48 = sadd.s32 %s47, 1
    %p51 = scmp.eq.s32.totalorder %s13, 1
    %p52 = scmp.ne.s32.totalorder %s47, %s49
    %p53 = scmp.eq.s32.totalorder %s13, 0
    %p54 = por %p52, %p53
    %p55 = scmp.ne.s32.totalorder %s47, %s49
    %p56 = scmp.eq.s32.totalorder %s18, 1
    %p57 = por %p55, %p56
    %p58 = scmp.ne.s32.totalorder %s49, %s50
    %p59 = scmp.eq.s32.totalorder %s18, 0
    %p60 = por %p58, %p59
    %p61 = scmp.ne.s32.totalorder %s49, %s50
    %p62 = scmp.eq.s32.totalorder %s19, 1
    %p63 = por %p61, %p62
    %p65 = scmp.ne.s32.totalorder %s50, %s64
    %p66 = scmp.eq.s32.totalorder %s19, 0
    %p67 = por %p65, %p66
    %s69 = sadd.s32 %s68, 1
    %p72 = scmp.eq.s32.totalorder %s13, 1
    %p73 = scmp.ne.s32.totalorder %s68, %s70
    %p74 = scmp.eq.s32.totalorder %s13, 0
    %p75 = por %p73, %p74
    %p76 = scmp.ne.s32.totalorder %s68, %s70
    %p77 = scmp.eq.s32.totalorder %s18, 1
    %p78 = por %p76, %p77
    %p79 = scmp.ne.s32.totalorder %s70, %s71
    %p80 = scmp.eq.s32.totalorder %s18, 0
    %p81 = por %p79, %p80
    %p82 = scmp.ne.s32.totalorder %s70, %s71
    %p83 = scmp.eq.s32.totalorder %s19, 1
    %p84 = por %p82, %p83
    %p86 = scmp.ne.s32.totalorder %s71, %s85
    %p87 = scmp.eq.s32.totalorder %s19, 0
    %p88 = por %p86, %p87
    %s90 = sadd.s32 %s89, 1
    %p93 = scmp.eq.s32.totalorder %s13, 1
    %p94 = scmp.ne.s32.totalorder %s89, %s91
    %p95 = scmp.eq.s32.totalorder %s13, 0
    %p96 = por %p94, %p95
    %p97 = scmp.ne.s32.totalorder %s89, %s91
    %p98 = scmp.eq.s32.totalorder %s18, 1
    %p99 = por %p97, %p98
    %p100 = scmp.ne.s32.totalorder %s91, %s92
    %p101 = scmp.eq.s32.totalorder %s18, 0
    %p102 = por %p100, %p101
    %p103 = scmp.ne.s32.totalorder %s91, %s92
    %p104 = scmp.eq.s32.totalorder %s19, 1
    %p105 = por %p103, %p104
    %p107 = scmp.ne.s32.totalorder %s92, %s106
    %p108 = scmp.eq.s32.totalorder %s19, 0
    %p109 = por %p107, %p108
    %s111 = sadd.s32 %s110, 1
    %p114 = scmp.eq.s32.totalorder %s13, 1
    %p115 = scmp.ne.s32.totalorder %s110, %s112
    %p116 = scmp.eq.s32.totalorder %s13, 0
    %p117 = por %p115, %p116
    %p118 = scmp.ne.s32.totalorder %s110, %s112
    %p119 = scmp.eq.s32.totalorder %s18, 1
    %p120 = por %p118, %p119
    %p121 = scmp.ne.s32.totalorder %s112, %s113
    %p122 = scmp.eq.s32.totalorder %s18, 0
    %p123 = por %p121, %p122
    %p124 = scmp.ne.s32.totalorder %s112, %s113
    %p125 = scmp.eq.s32.totalorder %s19, 1
    %p126 = por %p124, %p125
    %p128 = scmp.ne.s32.totalorder %s113, %s127
    %p129 = scmp.eq.s32.totalorder %s19, 0
    %p130 = por %p128, %p129
    %s132 = sadd.s32 %s131, 1
    %p135 = scmp.eq.s32.totalorder %s13, 1
    %p136 = scmp.ne.s32.totalorder %s131, %s133
    %p137 = scmp.eq.s32.totalorder %s13, 0
    %p138 = por %p136, %p137
    %p139 = scmp.ne.s32.totalorder %s131, %s133
    %p140 = scmp.eq.s32.totalorder %s18, 1
    %p141 = por %p139, %p140
    %p142 = scmp.ne.s32.totalorder %s133, %s134
    %p143 = scmp.eq.s32.totalorder %s18, 0
    %p144 = por %p142, %p143
    %p145 = scmp.ne.s32.totalorder %s133, %s134
    %p146 = scmp.eq.s32.totalorder %s19, 1
    %p147 = por %p145, %p146
    %p149 = scmp.ne.s32.totalorder %s134, %s148
    %p150 = scmp.eq.s32.totalorder %s19, 0
    %p151 = por %p149, %p150
    %s153 = sadd.s32 %s152, 1
    %p156 = scmp.eq.s32.totalorder %s13, 1
    %p157 = scmp.ne.s32.totalorder %s152, %s154
    %p158 = scmp.eq.s32.totalorder %s13, 0
    %p159 = por %p157, %p158
    %p160 = scmp.ne.s32.totalorder %s152, %s154
    %p161 = scmp.eq.s32.totalorder %s18, 1
    %p162 = por %p160, %p161
    %p163 = scmp.ne.s32.totalorder %s154, %s155
    %p164 = scmp.eq.s32.totalorder %s18, 0
    %p165 = por %p163, %p164
    %p166 = scmp.ne.s32.totalorder %s154, %s155
    %p167 = scmp.eq.s32.totalorder %s19, 1
    %p168 = por %p166, %p167
    %p170 = scmp.ne.s32.totalorder %s155, %s169
    %p171 = scmp.eq.s32.totalorder %s19, 0
    %p172 = por %p170, %p171
    %s173 = ssub.s32 %s13, %s20
    %p174 = scmp.eq.s32.totalorder %s173, 0
    %s176 = sadd.s32 %s175, 1
    %s177 = scalar_select %p174, %s175, %s176
    %p180 = pneg %p174
    %p181 = scmp.eq.s32.totalorder %s13, 1
    %p182 = por %p180, %p181
    %p183 = scmp.ne.s32.totalorder %s175, %s178
    %p184 = scmp.eq.s32.totalorder %s13, 0
    %p185 = por %p183, %p184
    %p186 = scmp.ne.s32.totalorder %s175, %s178
    %p187 = scmp.eq.s32.totalorder %s18, 1
    %p188 = por %p186, %p187
    %p189 = scmp.ne.s32.totalorder %s178, %s179
    %p190 = scmp.eq.s32.totalorder %s18, 0
    %p191 = por %p189, %p190
    %p192 = scmp.ne.s32.totalorder %s178, %s179
    %p193 = scmp.eq.s32.totalorder %s19, 1
    %p194 = por %p192, %p193
    %p196 = scmp.ne.s32.totalorder %s179, %s195
    %p197 = scmp.eq.s32.totalorder %s19, 0
    %p198 = por %p196, %p197
    %p199 = scmp.le.s32.totalorder 1, %s13
    %p200 = scmp.lt.s32.totalorder %s13, 3
    %p201 = pnand %p199, %p200
    %p202 = pneg %p201
    // Predicated region
    $region9: #{dqnet_forward.1} parent=5 // pred_check
      _
    $region10: #{dqnet_forward.1} parent=5 // pred_check_branch
      %204 = sbr.rel (%p201) target = $region12
    $region11: #{dqnet_forward.1} parent=5 // pred_region
      %s205 = ssub.s32 %s13, 1
      // Predicated region
      $region13: #{dqnet_forward.1} parent=11 // pred_check
        %p206 = pneg %p60
      $region14: #{dqnet_forward.1} parent=11 // pred_check_branch
        %208 = sbr.rel (%p206) target = $region16
      $region15: #{dqnet_forward.1} parent=11 // pred_region
        _
      $region16: #{dqnet_forward.1} parent=11 // pred_fallthru
        _
      // Predicated region
      $region17: #{dqnet_forward.1} parent=11 // pred_check
        %p209 = pneg %p81
      $region18: #{dqnet_forward.1} parent=11 // pred_check_branch
        %211 = sbr.rel (%p209) target = $region20
      $region19: #{dqnet_forward.1} parent=11 // pred_region
        _
      $region20: #{dqnet_forward.1} parent=11 // pred_fallthru
        _
      // Predicated region
      $region21: #{dqnet_forward.1} parent=11 // pred_check
        %p212 = pneg %p102
      $region22: #{dqnet_forward.1} parent=11 // pred_check_branch
        %214 = sbr.rel (%p212) target = $region24
      $region23: #{dqnet_forward.1} parent=11 // pred_region
        _
      $region24: #{dqnet_forward.1} parent=11 // pred_fallthru
        _
      // Predicated region
      $region25: #{dqnet_forward.1} parent=11 // pred_check
        %p215 = pneg %p123
      $region26: #{dqnet_forward.1} parent=11 // pred_check_branch
        %217 = sbr.rel (%p215) target = $region28
      $region27: #{dqnet_forward.1} parent=11 // pred_region
        _
      $region28: #{dqnet_forward.1} parent=11 // pred_fallthru
        _
      // Predicated region
      $region29: #{dqnet_forward.1} parent=11 // pred_check
        %p218 = pneg %p144
      $region30: #{dqnet_forward.1} parent=11 // pred_check_branch
        %220 = sbr.rel (%p218) target = $region32
      $region31: #{dqnet_forward.1} parent=11 // pred_region
        _
      $region32: #{dqnet_forward.1} parent=11 // pred_fallthru
        _
      // Predicated region
      $region33: #{dqnet_forward.1} parent=11 // pred_check
        %p221 = pneg %p165
      $region34: #{dqnet_forward.1} parent=11 // pred_check_branch
        %223 = sbr.rel (%p221) target = $region36
      $region35: #{dqnet_forward.1} parent=11 // pred_region
        _
      $region36: #{dqnet_forward.1} parent=11 // pred_fallthru
        _
    $region12: #{dqnet_forward.1} parent=5 // pred_fallthru
      _
    %p224 = scmp.lt.s32.totalorder %s13, 2
    // Predicated region
    $region37: #{dqnet_forward.1} parent=5 // pred_check
      %p225 = pneg %p224
    $region38: #{dqnet_forward.1} parent=5 // pred_check_branch
      %227 = sbr.rel (%p225) target = $region40
    $region39: #{dqnet_forward.1} parent=5 // pred_region
      // Predicated region
      $region41: #{dqnet_forward.1} parent=39 // pred_check
        %p228 = pneg %p33
      $region42: #{dqnet_forward.1} parent=39 // pred_check_branch
        %230 = sbr.rel (%p228) target = $region44
      $region43: #{dqnet_forward.1} parent=39 // pred_region
        %p231 = scmp.lt.s32.totalorder %s13, 1
        %s232 = scalar_select %p231, %s13, 1
        %s233 = smul.addr %s232, 8
        %s234 = scalar_lea.vmem %s0, %s233
      $region44: #{dqnet_forward.1} parent=39 // pred_fallthru
        _
    $region40: #{dqnet_forward.1} parent=5 // pred_fallthru
      _
    %p235 = scmp.le.s32.totalorder 1, %s13
    %p236 = scmp.lt.s32.totalorder %s13, 3
    %p237 = pnand %p235, %p236
    %p238 = pneg %p237
    // Predicated region
    $region45: #{dqnet_forward.1} parent=5 // pred_check
      _
    $region46: #{dqnet_forward.1} parent=5 // pred_check_branch
      %240 = sbr.rel (%p237) target = $region48
    $region47: #{dqnet_forward.1} parent=5 // pred_region
      %s241 = ssub.s32 %s13, 1
      %p242 = scmp.lt.s32.totalorder %s18, 1
      %s243 = scalar_select %p242, %s18, 1
      %s244 = smul.addr %s243, 8
      %s245 = scalar_lea.vmem %s0, %s244
      %p246 = pneg %p39
      %p247 = pneg %p36
      %p248 = pneg %p60
      %p249 = pneg %p57
      %p250 = pneg %p81
      %p251 = pneg %p78
      %p252 = pneg %p102
      %p253 = pneg %p99
      %p254 = pneg %p123
      %p255 = pneg %p120
      %p256 = pneg %p144
      %p257 = pneg %p141
      %p258 = pneg %p165
      %p259 = pneg %p162
      %p260 = pneg %p191
      %p261 = pneg %p188
      %p262 = scmp.lt.s32.totalorder %s18, 1
      %s263 = scalar_select %p262, %s18, 1
      %s264 = smul.addr %s263, 8
      %s265 = scalar_lea.vmem %s7, %s264
      %p266 = scmp.lt.s32.totalorder %s18, 1
      %s267 = scalar_select %p266, %s18, 1
      %s268 = smul.addr %s267, 8
      %s269 = scalar_lea.vmem %s0, %s268
      %p270 = scmp.lt.s32.totalorder %s18, 1
      %s271 = scalar_select %p270, %s18, 1
      %s272 = smul.addr %s271, 8
      %s273 = scalar_lea.vmem %s7, %s272
      %v275 = vld [vmem:[%s1] sm:$0xff]
      %v276 = vld [vmem:[%s1 + $0x8] sm:$0xff]
      %v277 = vld [vmem:[%s1 + $0x10] sm:$0xff]
      %v278 = vld [vmem:[%s1 + $0x18] sm:$0xff]
      %v279 = vld [vmem:[%s1 + $0x20] sm:$0xff]
      %v280 = vld [vmem:[%s1 + $0x28] sm:$0xff]
      %v281 = vld [vmem:[%s1 + $0x30] sm:$0xff]
      %v282 = vld [vmem:[%s1 + $0x38] sm:$0xff]
      %v283 = vld [vmem:[%s1 + $0x40] sm:$0xff]
      %v284 = vld [vmem:[%s1 + $0x48] sm:$0xff]
      %v285 = vld [vmem:[%s1 + $0x50] sm:$0xff]
      %v286 = vld [vmem:[%s1 + $0x58] sm:$0xff]
      %v287 = vld [vmem:[%s1 + $0x60] sm:$0xff]
      %v288 = vld [vmem:[%s1 + $0x68] sm:$0xff]
      %v289 = vld [vmem:[%s1 + $0x70] sm:$0xff]
      %v290 = vld [vmem:[%s1 + $0x78] sm:$0xff]
      %v291 = vld [vmem:[%s269] sm:$0xff]
      %v292 = vld [vmem:[%s2] sm:$0xff]
      %v293 = vld [vmem:[%s2 + $0x8] sm:$0xff]
      %v294 = vld [vmem:[%s2 + $0x10] sm:$0xff]
      %v295 = vld [vmem:[%s2 + $0x18] sm:$0xff]
      %v296 = vld [vmem:[%s2 + $0x20] sm:$0xff]
      %v297 = vld [vmem:[%s2 + $0x28] sm:$0xff]
      %v298 = vld [vmem:[%s2 + $0x30] sm:$0xff]
      %v299 = vld [vmem:[%s2 + $0x38] sm:$0xff]
      %v300 = vld [vmem:[%s2 + $0x40] sm:$0xff]
      %v301 = vld [vmem:[%s2 + $0x48] sm:$0xff]
      %v302 = vld [vmem:[%s2 + $0x50] sm:$0xff]
      %v303 = vld [vmem:[%s2 + $0x58] sm:$0xff]
      %v304 = vld [vmem:[%s2 + $0x60] sm:$0xff]
      %v305 = vld [vmem:[%s2 + $0x68] sm:$0xff]
      %v306 = vld [vmem:[%s2 + $0x70] sm:$0xff]
      %v307 = vld [vmem:[%s2 + $0x78] sm:$0xff]
      %309 = vset.pattern.permute.xlu0 0
      %310 = vperm.xlu0 %309, %v292
      %v311 = vpop.permute.xlu0 %310
      %314 = vset.pattern.permute.xlu0 0
      %315 = vperm.xlu0 %314, %v293
      %v316 = vpop.permute.xlu0 %315
      %319 = vset.pattern.permute.xlu0 0
      %320 = vperm.xlu0 %319, %v294
      %v321 = vpop.permute.xlu0 %320
      %324 = vset.pattern.permute.xlu0 0
      %325 = vperm.xlu0 %324, %v295
      %v326 = vpop.permute.xlu0 %325
      %329 = vset.pattern.permute.xlu0 0
      %330 = vperm.xlu0 %329, %v296
      %v331 = vpop.permute.xlu0 %330
      %334 = vset.pattern.permute.xlu0 0
      %335 = vperm.xlu0 %334, %v297
      %v336 = vpop.permute.xlu0 %335
      %339 = vset.pattern.permute.xlu0 0
      %340 = vperm.xlu0 %339, %v298
      %v341 = vpop.permute.xlu0 %340
      %344 = vset.pattern.permute.xlu0 0
      %345 = vperm.xlu0 %344, %v299
      %v346 = vpop.permute.xlu0 %345
      %349 = vset.pattern.permute.xlu0 0
      %350 = vperm.xlu0 %349, %v300
      %v351 = vpop.permute.xlu0 %350
      %354 = vset.pattern.permute.xlu0 0
      %355 = vperm.xlu0 %354, %v301
      %v356 = vpop.permute.xlu0 %355
      %359 = vset.pattern.permute.xlu0 0
      %360 = vperm.xlu0 %359, %v302
      %v361 = vpop.permute.xlu0 %360
      %364 = vset.pattern.permute.xlu0 0
      %365 = vperm.xlu0 %364, %v303
      %v366 = vpop.permute.xlu0 %365
      %369 = vset.pattern.permute.xlu0 0
      %370 = vperm.xlu0 %369, %v304
      %v371 = vpop.permute.xlu0 %370
      %374 = vset.pattern.permute.xlu0 0
      %375 = vperm.xlu0 %374, %v305
      %v376 = vpop.permute.xlu0 %375
      %379 = vset.pattern.permute.xlu0 0
      %380 = vperm.xlu0 %379, %v306
      %v381 = vpop.permute.xlu0 %380
      %384 = vset.pattern.permute.xlu0 0
      %385 = vperm.xlu0 %384, %v307
      %v386 = vpop.permute.xlu0 %385
      %vm388 = vcmask 64512
      %v390 = vsel %vm388, %v275, 0
      %v393 = vsel %vm388, %v276, 0
      %v396 = vsel %vm388, %v277, 0
      %v399 = vsel %vm388, %v278, 0
      %v402 = vsel %vm388, %v279, 0
      %v405 = vsel %vm388, %v280, 0
      %v408 = vsel %vm388, %v281, 0
      %v411 = vsel %vm388, %v282, 0
      %v414 = vsel %vm388, %v283, 0
      %v417 = vsel %vm388, %v284, 0
      %v420 = vsel %vm388, %v285, 0
      %v423 = vsel %vm388, %v286, 0
      %v426 = vsel %vm388, %v287, 0
      %v429 = vsel %vm388, %v288, 0
      %v432 = vsel %vm388, %v289, 0
      %v435 = vsel %vm388, %v290, 0
      %437 = vmatprep.subr.mxu0 0.0
      %438 = vmatpush1.msra.mxu0 %v291
      %439 = vmatprep.subr.mxu0 0.0
      %440 = vmatpush1.msra.mxu0 0.0
      %441 = vmatprep.subr.mxu0 0.0
      %442 = vmatpush1.msra.mxu0 0.0
      %443 = vmatprep.subr.mxu0 0.0
      %444 = vmatpush1.msra.mxu0 0.0
      %445 = vmatprep.subr.mxu0 0.0
      %446 = vmatpush1.msra.mxu0 0.0
      %447 = vmatprep.subr.mxu0 0.0
      %448 = vmatpush1.msra.mxu0 0.0
      %449 = vmatprep.subr.mxu0 0.0
      %450 = vmatpush1.msra.mxu0 0.0
      %451 = vmatprep.subr.mxu0 0.0
      %452 = vmatpush1.msra.mxu0 0.0
      %453 = vmatprep.subr.mxu0 0.0
      %454 = vmatpush1.msra.mxu0 0.0
      %455 = vmatprep.subr.mxu0 0.0
      %456 = vmatpush1.msra.mxu0 0.0
      %457 = vmatprep.subr.mxu0 0.0
      %458 = vmatpush1.msra.mxu0 0.0
      %459 = vmatprep.subr.mxu0 0.0
      %460 = vmatpush1.msra.mxu0 0.0
      %461 = vmatprep.subr.mxu0 0.0
      %462 = vmatpush1.msra.mxu0 0.0
      %463 = vmatprep.subr.mxu0 0.0
      %464 = vmatpush1.msra.mxu0 0.0
      %465 = vmatprep.subr.mxu0 0.0
      %466 = vmatpush1.msra.mxu0 0.0
      %467 = vmatprep.subr.mxu0 0.0
      %468 = vmatpush1.msra.mxu0 0.0
      %469 = vmatprep.subr.mxu0 0.0
      %470 = vmatpush1.msra.mxu0 0.0
      %471 = vmatprep.subr.mxu0 0.0
      %472 = vmatpush1.msra.mxu0 0.0
      %473 = vmatprep.subr.mxu0 0.0
      %474 = vmatpush1.msra.mxu0 0.0
      %475 = vmatprep.subr.mxu0 0.0
      %476 = vmatpush1.msra.mxu0 0.0
      %477 = vmatprep.subr.mxu0 0.0
      %478 = vmatpush1.msra.mxu0 0.0
      %479 = vmatprep.subr.mxu0 0.0
      %480 = vmatpush1.msra.mxu0 0.0
      %481 = vmatprep.subr.mxu0 0.0
      %482 = vmatpush1.msra.mxu0 0.0
      %483 = vmatprep.subr.mxu0 0.0
      %484 = vmatpush1.msra.mxu0 0.0
      %485 = vmatprep.subr.mxu0 0.0
      %486 = vmatpush1.msra.mxu0 0.0
      %487 = vmatprep.subr.mxu0 0.0
      %488 = vmatpush1.msra.mxu0 0.0
      %489 = vmatprep.subr.mxu0 0.0
      %490 = vmatpush1.msra.mxu0 0.0
      %491 = vmatprep.subr.mxu0 0.0
      %492 = vmatpush1.msra.mxu0 0.0
      %493 = vmatprep.subr.mxu0 0.0
      %494 = vmatpush1.msra.mxu0 0.0
      %495 = vmatprep.subr.mxu0 0.0
      %496 = vmatpush1.msra.mxu0 0.0
      %497 = vmatprep.subr.mxu0 0.0
      %498 = vmatpush1.msra.mxu0 0.0
      %499 = vmatprep.subr.mxu0 0.0
      %500 = vmatpush1.msra.mxu0 0.0
      %501 = vmatprep.mubr.f32.mxu0 0.0
      %502 = vmatmul.mubr.f32.gmra.mrb[0].mxu0 %v390
      %v503 = vpop.f32.mrb[0].mxu0
      %v504 = vadd.f32 %v311, %v503
      %v505 = vpop.f32.mrb[0].mxu0
      %506 = vmatprep.mubr.f32.mxu0 0.0
      %507 = vmatmul.mubr.f32.gmra.mrb[0].mxu0 %v393
      %v508 = vpop.f32.mrb[0].mxu0
      %v509 = vadd.f32 %v316, %v508
      %v510 = vpop.f32.mrb[0].mxu0
      %511 = vmatprep.mubr.f32.mxu0 0.0
      %512 = vmatmul.mubr.f32.gmra.mrb[0].mxu0 %v396
      %v513 = vpop.f32.mrb[0].mxu0
      %v514 = vadd.f32 %v321, %v513
      %v515 = vpop.f32.mrb[0].mxu0
      %516 = vmatprep.mubr.f32.mxu0 0.0
      %517 = vmatmul.mubr.f32.gmra.mrb[0].mxu0 %v399
      %v518 = vpop.f32.mrb[0].mxu0
      %v519 = vadd.f32 %v326, %v518
      %v520 = vpop.f32.mrb[0].mxu0
      %521 = vmatprep.mubr.f32.mxu0 0.0
      %522 = vmatmul.mubr.f32.gmra.mrb[0].mxu0 %v402
      %v523 = vpop.f32.mrb[0].mxu0
      %v524 = vadd.f32 %v331, %v523
      %v525 = vpop.f32.mrb[0].mxu0
      %526 = vmatprep.mubr.f32.mxu0 0.0
      %527 = vmatmul.mubr.f32.gmra.mrb[0].mxu0 %v405
      %v528 = vpop.f32.mrb[0].mxu0
      %v529 = vadd.f32 %v336, %v528
      %v530 = vpop.f32.mrb[0].mxu0
      %531 = vmatprep.mubr.f32.mxu0 0.0
      %532 = vmatmul.mubr.f32.gmra.mrb[0].mxu0 %v408
      %v533 = vpop.f32.mrb[0].mxu0
      %v534 = vadd.f32 %v341, %v533
      %v535 = vpop.f32.mrb[0].mxu0
      %536 = vmatprep.mubr.f32.mxu0 0.0
      %537 = vmatmul.mubr.f32.gmra.mrb[0].mxu0 %v411
      %v538 = vpop.f32.mrb[0].mxu0
      %v539 = vadd.f32 %v346, %v538
      %v540 = vpop.f32.mrb[0].mxu0
      %541 = vmatprep.mubr.f32.mxu0 0.0
      %542 = vmatmul.mubr.f32.gmra.mrb[0].mxu0 %v414
      %v543 = vpop.f32.mrb[0].mxu0
      %v544 = vadd.f32 %v351, %v543
      %v545 = vpop.f32.mrb[0].mxu0
      %546 = vmatprep.mubr.f32.mxu0 0.0
      %547 = vmatmul.mubr.f32.gmra.mrb[0].mxu0 %v417
      %v548 = vpop.f32.mrb[0].mxu0
      %v549 = vadd.f32 %v356, %v548
      %v550 = vpop.f32.mrb[0].mxu0
      %551 = vmatprep.mubr.f32.mxu0 0.0
      %552 = vmatmul.mubr.f32.gmra.mrb[0].mxu0 %v420
      %v553 = vpop.f32.mrb[0].mxu0
      %v554 = vadd.f32 %v361, %v553
      %v555 = vpop.f32.mrb[0].mxu0
      %556 = vmatprep.mubr.f32.mxu0 0.0
      %557 = vmatmul.mubr.f32.gmra.mrb[0].mxu0 %v423
      %v558 = vpop.f32.mrb[0].mxu0
      %v559 = vadd.f32 %v366, %v558
      %v560 = vpop.f32.mrb[0].mxu0
      %561 = vmatprep.mubr.f32.mxu0 0.0
      %562 = vmatmul.mubr.f32.gmra.mrb[0].mxu0 %v426
      %v563 = vpop.f32.mrb[0].mxu0
      %v564 = vadd.f32 %v371, %v563
      %v565 = vpop.f32.mrb[0].mxu0
      %566 = vmatprep.mubr.f32.mxu0 0.0
      %567 = vmatmul.mubr.f32.gmra.mrb[0].mxu0 %v429
      %v568 = vpop.f32.mrb[0].mxu0
      %v569 = vadd.f32 %v376, %v568
      %v570 = vpop.f32.mrb[0].mxu0
      %571 = vmatprep.mubr.f32.mxu0 0.0
      %572 = vmatmul.mubr.f32.gmra.mrb[0].mxu0 %v432
      %v573 = vpop.f32.mrb[0].mxu0
      %v574 = vadd.f32 %v381, %v573
      %v575 = vpop.f32.mrb[0].mxu0
      %576 = vmatprep.mubr.f32.mxu0 0.0
      %577 = vmatmul.mubr.f32.gmra.mrb[0].mxu0 %v435
      %v578 = vpop.f32.mrb[0].mxu0
      %v579 = vadd.f32 %v386, %v578
      %v580 = vpop.f32.mrb[0].mxu0
      %581 = vdwg.mxu0
      %v582 = vld [vmem:[%s3] sm:$0xf]
      %v583 = vld [vmem:[%s3 + $0x4] sm:$0xf]
      %v584 = vld [vmem:[%s3 + $0x8] sm:$0xf]
      %v585 = vld [vmem:[%s3 + $0xc] sm:$0xf]
      %v586 = vld [vmem:[%s3 + $0x10] sm:$0xf]
      %v587 = vld [vmem:[%s3 + $0x14] sm:$0xf]
      %v588 = vld [vmem:[%s3 + $0x18] sm:$0xf]
      %v589 = vld [vmem:[%s3 + $0x1c] sm:$0xf]
      %v590 = vld [vmem:[%s3 + $0x20] sm:$0xf]
      %v591 = vld [vmem:[%s3 + $0x24] sm:$0xf]
      %v592 = vld [vmem:[%s3 + $0x28] sm:$0xf]
      %v593 = vld [vmem:[%s3 + $0x2c] sm:$0xf]
      %v594 = vld [vmem:[%s3 + $0x30] sm:$0xf]
      %v595 = vld [vmem:[%s3 + $0x34] sm:$0xf]
      %v596 = vld [vmem:[%s3 + $0x38] sm:$0xf]
      %v597 = vld [vmem:[%s3 + $0x3c] sm:$0xf]
      %v598 = vpack.c.bf16 %v509, %v504
      %v599 = vpack.c.bf16 %v519, %v514
      %v600 = vpack.c.bf16 %v529, %v524
      %v601 = vpack.c.bf16 %v539, %v534
      %v602 = vpack.c.bf16 %v549, %v544
      %v603 = vpack.c.bf16 %v559, %v554
      %v604 = vpack.c.bf16 %v569, %v564
      %v605 = vpack.c.bf16 %v579, %v574
      %v606 = vld [vmem:[%s4] sm:$0xff]
      %v607 = vld [vmem:[%s4 + $0x8] sm:$0xff]
      %v608 = vld [vmem:[%s4 + $0x10] sm:$0xff]
      %v609 = vld [vmem:[%s4 + $0x18] sm:$0xff]
      %v610 = vld [vmem:[%s4 + $0x20] sm:$0xff]
      %v611 = vld [vmem:[%s4 + $0x28] sm:$0xff]
      %v612 = vld [vmem:[%s4 + $0x30] sm:$0xff]
      %v613 = vld [vmem:[%s4 + $0x38] sm:$0xff]
      %v614 = vld [vmem:[%s4 + $0x40] sm:$0xff]
      %v615 = vld [vmem:[%s4 + $0x48] sm:$0xff]
      %v616 = vld [vmem:[%s4 + $0x50] sm:$0xff]
      %v617 = vld [vmem:[%s4 + $0x58] sm:$0xff]
      %v618 = vld [vmem:[%s4 + $0x60] sm:$0xff]
      %v619 = vld [vmem:[%s4 + $0x68] sm:$0xff]
      %v620 = vld [vmem:[%s4 + $0x70] sm:$0xff]
      %v621 = vld [vmem:[%s4 + $0x78] sm:$0xff]
      %623 = vset.pattern.permute.xlu0 0
      %624 = vperm.xlu0 %623, %v606
      %v625 = vpop.permute.xlu0 %624
      %628 = vset.pattern.permute.xlu0 0
      %629 = vperm.xlu0 %628, %v607
      %v630 = vpop.permute.xlu0 %629
      %633 = vset.pattern.permute.xlu0 0
      %634 = vperm.xlu0 %633, %v608
      %v635 = vpop.permute.xlu0 %634
      %638 = vset.pattern.permute.xlu0 0
      %639 = vperm.xlu0 %638, %v609
      %v640 = vpop.permute.xlu0 %639
      %643 = vset.pattern.permute.xlu0 0
      %644 = vperm.xlu0 %643, %v610
      %v645 = vpop.permute.xlu0 %644
      %648 = vset.pattern.permute.xlu0 0
      %649 = vperm.xlu0 %648, %v611
      %v650 = vpop.permute.xlu0 %649
      %653 = vset.pattern.permute.xlu0 0
      %654 = vperm.xlu0 %653, %v612
      %v655 = vpop.permute.xlu0 %654
      %658 = vset.pattern.permute.xlu0 0
      %659 = vperm.xlu0 %658, %v613
      %v660 = vpop.permute.xlu0 %659
      %663 = vset.pattern.permute.xlu0 0
      %664 = vperm.xlu0 %663, %v614
      %v665 = vpop.permute.xlu0 %664
      %668 = vset.pattern.permute.xlu0 0
      %669 = vperm.xlu0 %668, %v615
      %v670 = vpop.permute.xlu0 %669
      %673 = vset.pattern.permute.xlu0 0
      %674 = vperm.xlu0 %673, %v616
      %v675 = vpop.permute.xlu0 %674
      %678 = vset.pattern.permute.xlu0 0
      %679 = vperm.xlu0 %678, %v617
      %v680 = vpop.permute.xlu0 %679
      %683 = vset.pattern.permute.xlu0 0
      %684 = vperm.xlu0 %683, %v618
      %v685 = vpop.permute.xlu0 %684
      %688 = vset.pattern.permute.xlu0 0
      %689 = vperm.xlu0 %688, %v619
      %v690 = vpop.permute.xlu0 %689
      %693 = vset.pattern.permute.xlu0 0
      %694 = vperm.xlu0 %693, %v620
      %v695 = vpop.permute.xlu0 %694
      %698 = vset.pattern.permute.xlu0 0
      %699 = vperm.xlu0 %698, %v621
      %v700 = vpop.permute.xlu0 %699
      %v718 = vunpack.c.l.b16 %v582
      %v719 = vunpack.c.l.b16 %v583
      %v720 = vunpack.c.l.b16 %v584
      %v721 = vunpack.c.l.b16 %v585
      %v722 = vunpack.c.l.b16 %v586
      %v723 = vunpack.c.l.b16 %v587
      %v724 = vunpack.c.l.b16 %v588
      %v725 = vunpack.c.l.b16 %v589
      %v726 = vunpack.c.l.b16 %v590
      %v727 = vunpack.c.l.b16 %v591
      %v728 = vunpack.c.l.b16 %v592
      %v729 = vunpack.c.l.b16 %v593
      %v730 = vunpack.c.l.b16 %v594
      %v731 = vunpack.c.l.b16 %v595
      %v732 = vunpack.c.l.b16 %v596
      %v733 = vunpack.c.l.b16 %v597
      %v734 = vpack.c.b16 %v719, %v718
      %v735 = vpack.c.b16 %v721, %v720
      %v736 = vpack.c.b16 %v723, %v722
      %v737 = vpack.c.b16 %v725, %v724
      %v738 = vpack.c.b16 %v727, %v726
      %v739 = vpack.c.b16 %v729, %v728
      %v740 = vpack.c.b16 %v731, %v730
      %v741 = vpack.c.b16 %v733, %v732
      %750 = vmatprep.subr.bf16.mxu0 0
      %751 = vmatpush1.bf16.msra.mxu0 %v598
      %752 = vmatprep.subr.bf16.mxu0 0
      %753 = vmatpush1.bf16.msra.mxu0 %v599
      %754 = vmatprep.subr.bf16.mxu0 0
      %755 = vmatpush1.bf16.msra.mxu0 %v600
      %756 = vmatprep.subr.bf16.mxu0 0
      %757 = vmatpush1.bf16.msra.mxu0 %v601
      %758 = vmatprep.subr.bf16.mxu0 0
      %759 = vmatpush1.bf16.msra.mxu0 %v602
      %760 = vmatprep.subr.bf16.mxu0 0
      %761 = vmatpush1.bf16.msra.mxu0 %v603
      %762 = vmatprep.subr.bf16.mxu0 0
      %763 = vmatpush1.bf16.msra.mxu0 %v604
      %764 = vmatprep.subr.bf16.mxu0 0
      %765 = vmatpush1.bf16.msra.mxu0 %v605
      %766 = vmatprep.subr.bf16.mxu0 0
      %767 = vmatpush1.bf16.msra.mxu0 0
      %768 = vmatprep.subr.bf16.mxu0 0
      %769 = vmatpush1.bf16.msra.mxu0 0
      %770 = vmatprep.subr.bf16.mxu0 0
      %771 = vmatpush1.bf16.msra.mxu0 0
      %772 = vmatprep.subr.bf16.mxu0 0
      %773 = vmatpush1.bf16.msra.mxu0 0
      %774 = vmatprep.subr.bf16.mxu0 0
      %775 = vmatpush1.bf16.msra.mxu0 0
      %776 = vmatprep.subr.bf16.mxu0 0
      %777 = vmatpush1.bf16.msra.mxu0 0
      %778 = vmatprep.subr.bf16.mxu0 0
      %779 = vmatpush1.bf16.msra.mxu0 0
      %780 = vmatprep.subr.bf16.mxu0 0
      %781 = vmatpush1.bf16.msra.mxu0 0
      %782 = vmatprep.mubr.bf16.mxu0 0
      %783 = vmatmul.mubr.bf16.gmra.mrb[0].mxu0 %v734
      %v784 = vpop.f32.mrb[0].mxu0
      %v785 = vadd.f32 %v625, %v784
      %v786 = vpop.f32.mrb[0].mxu0
      %v787 = vpop.f32.mrb[0].mxu0
      %v788 = vadd.f32 %v630, %v787
      %v789 = vpop.f32.mrb[0].mxu0
      %790 = vmatprep.mubr.bf16.mxu0 0
      %791 = vmatmul.mubr.bf16.gmra.mrb[0].mxu0 %v735
      %v792 = vpop.f32.mrb[0].mxu0
      %v793 = vadd.f32 %v635, %v792
      %v794 = vpop.f32.mrb[0].mxu0
      %v795 = vpop.f32.mrb[0].mxu0
      %v796 = vadd.f32 %v640, %v795
      %v797 = vpop.f32.mrb[0].mxu0
      %798 = vmatprep.mubr.bf16.mxu0 0
      %799 = vmatmul.mubr.bf16.gmra.mrb[0].mxu0 %v736
      %v800 = vpop.f32.mrb[0].mxu0
      %v801 = vadd.f32 %v645, %v800
      %v802 = vpop.f32.mrb[0].mxu0
      %v803 = vpop.f32.mrb[0].mxu0
      %v804 = vadd.f32 %v650, %v803
      %v805 = vpop.f32.mrb[0].mxu0
      %806 = vmatprep.mubr.bf16.mxu0 0
      %807 = vmatmul.mubr.bf16.gmra.mrb[0].mxu0 %v737
      %v808 = vpop.f32.mrb[0].mxu0
      %v809 = vadd.f32 %v655, %v808
      %v810 = vpop.f32.mrb[0].mxu0
      %v811 = vpop.f32.mrb[0].mxu0
      %v812 = vadd.f32 %v660, %v811
      %v813 = vpop.f32.mrb[0].mxu0
      %814 = vmatprep.mubr.bf16.mxu0 0
      %815 = vmatmul.mubr.bf16.gmra.mrb[0].mxu0 %v738
      %v816 = vpop.f32.mrb[0].mxu0
      %v817 = vadd.f32 %v665, %v816
      %v818 = vpop.f32.mrb[0].mxu0
      %v819 = vpop.f32.mrb[0].mxu0
      %v820 = vadd.f32 %v670, %v819
      %v821 = vpop.f32.mrb[0].mxu0
      %822 = vmatprep.mubr.bf16.mxu0 0
      %823 = vmatmul.mubr.bf16.gmra.mrb[0].mxu0 %v739
      %v824 = vpop.f32.mrb[0].mxu0
      %v825 = vadd.f32 %v675, %v824
      %v826 = vpop.f32.mrb[0].mxu0
      %v827 = vpop.f32.mrb[0].mxu0
      %v828 = vadd.f32 %v680, %v827
      %v829 = vpop.f32.mrb[0].mxu0
      %830 = vmatprep.mubr.bf16.mxu0 0
      %831 = vmatmul.mubr.bf16.gmra.mrb[0].mxu0 %v740
      %v832 = vpop.f32.mrb[0].mxu0
      %v833 = vadd.f32 %v685, %v832
      %v834 = vpop.f32.mrb[0].mxu0
      %v835 = vpop.f32.mrb[0].mxu0
      %v836 = vadd.f32 %v690, %v835
      %v837 = vpop.f32.mrb[0].mxu0
      %838 = vmatprep.mubr.bf16.mxu0 0
      %839 = vmatmul.mubr.bf16.gmra.mrb[0].mxu0 %v741
      %v840 = vpop.f32.mrb[0].mxu0
      %v841 = vadd.f32 %v695, %v840
      %v842 = vpop.f32.mrb[0].mxu0
      %v843 = vpop.f32.mrb[0].mxu0
      %v844 = vadd.f32 %v700, %v843
      %v845 = vpop.f32.mrb[0].mxu0
      %846 = vdwg.mxu0
      %v847 = vmax.f32 %v785, 0.0
      %v848 = vmax.f32 %v788, 0.0
      %v849 = vmax.f32 %v793, 0.0
      %v850 = vmax.f32 %v796, 0.0
      %v851 = vmax.f32 %v801, 0.0
      %v852 = vmax.f32 %v804, 0.0
      %v853 = vmax.f32 %v809, 0.0
      %v854 = vmax.f32 %v812, 0.0
      %v855 = vmax.f32 %v817, 0.0
      %v856 = vmax.f32 %v820, 0.0
      %v857 = vmax.f32 %v825, 0.0
      %v858 = vmax.f32 %v828, 0.0
      %v859 = vmax.f32 %v833, 0.0
      %v860 = vmax.f32 %v836, 0.0
      %v861 = vmax.f32 %v841, 0.0
      %v862 = vmax.f32 %v844, 0.0
      %s863 = scalar_lea.vmem %s3, 64
      %v864 = vld [vmem:[%s863] sm:$0xf]
      %v865 = vld [vmem:[%s863 + $0x4] sm:$0xf]
      %v866 = vld [vmem:[%s863 + $0x8] sm:$0xf]
      %v867 = vld [vmem:[%s863 + $0xc] sm:$0xf]
      %v868 = vld [vmem:[%s863 + $0x10] sm:$0xf]
      %v869 = vld [vmem:[%s863 + $0x14] sm:$0xf]
      %v870 = vld [vmem:[%s863 + $0x18] sm:$0xf]
      %v871 = vld [vmem:[%s863 + $0x1c] sm:$0xf]
      %v872 = vld [vmem:[%s863 + $0x20] sm:$0xf]
      %v873 = vld [vmem:[%s863 + $0x24] sm:$0xf]
      %v874 = vld [vmem:[%s863 + $0x28] sm:$0xf]
      %v875 = vld [vmem:[%s863 + $0x2c] sm:$0xf]
      %v876 = vld [vmem:[%s863 + $0x30] sm:$0xf]
      %v877 = vld [vmem:[%s863 + $0x34] sm:$0xf]
      %v878 = vld [vmem:[%s863 + $0x38] sm:$0xf]
      %v879 = vld [vmem:[%s863 + $0x3c] sm:$0xf]
      %v880 = vpack.c.bf16 %v848, %v847
      %v881 = vpack.c.bf16 %v850, %v849
      %v882 = vpack.c.bf16 %v852, %v851
      %v883 = vpack.c.bf16 %v854, %v853
      %v884 = vpack.c.bf16 %v856, %v855
      %v885 = vpack.c.bf16 %v858, %v857
      %v886 = vpack.c.bf16 %v860, %v859
      %v887 = vpack.c.bf16 %v862, %v861
      %s888 = scalar_lea.vmem %s4, 128
      %v889 = vld [vmem:[%s888] sm:$0xff]
      %v890 = vld [vmem:[%s888 + $0x8] sm:$0xff]
      %v891 = vld [vmem:[%s888 + $0x10] sm:$0xff]
      %v892 = vld [vmem:[%s888 + $0x18] sm:$0xff]
      %v893 = vld [vmem:[%s888 + $0x20] sm:$0xff]
      %v894 = vld [vmem:[%s888 + $0x28] sm:$0xff]
      %v895 = vld [vmem:[%s888 + $0x30] sm:$0xff]
      %v896 = vld [vmem:[%s888 + $0x38] sm:$0xff]
      %v897 = vld [vmem:[%s888 + $0x40] sm:$0xff]
      %v898 = vld [vmem:[%s888 + $0x48] sm:$0xff]
      %v899 = vld [vmem:[%s888 + $0x50] sm:$0xff]
      %v900 = vld [vmem:[%s888 + $0x58] sm:$0xff]
      %v901 = vld [vmem:[%s888 + $0x60] sm:$0xff]
      %v902 = vld [vmem:[%s888 + $0x68] sm:$0xff]
      %v903 = vld [vmem:[%s888 + $0x70] sm:$0xff]
      %v904 = vld [vmem:[%s888 + $0x78] sm:$0xff]
      %906 = vset.pattern.permute.xlu0 0
      %907 = vperm.xlu0 %906, %v889
      %v908 = vpop.permute.xlu0 %907
      %911 = vset.pattern.permute.xlu0 0
      %912 = vperm.xlu0 %911, %v890
      %v913 = vpop.permute.xlu0 %912
      %916 = vset.pattern.permute.xlu0 0
      %917 = vperm.xlu0 %916, %v891
      %v918 = vpop.permute.xlu0 %917
      %921 = vset.pattern.permute.xlu0 0
      %922 = vperm.xlu0 %921, %v892
      %v923 = vpop.permute.xlu0 %922
      %926 = vset.pattern.permute.xlu0 0
      %927 = vperm.xlu0 %926, %v893
      %v928 = vpop.permute.xlu0 %927
      %931 = vset.pattern.permute.xlu0 0
      %932 = vperm.xlu0 %931, %v894
      %v933 = vpop.permute.xlu0 %932
      %936 = vset.pattern.permute.xlu0 0
      %937 = vperm.xlu0 %936, %v895
      %v938 = vpop.permute.xlu0 %937
      %941 = vset.pattern.permute.xlu0 0
      %942 = vperm.xlu0 %941, %v896
      %v943 = vpop.permute.xlu0 %942
      %946 = vset.pattern.permute.xlu0 0
      %947 = vperm.xlu0 %946, %v897
      %v948 = vpop.permute.xlu0 %947
      %951 = vset.pattern.permute.xlu0 0
      %952 = vperm.xlu0 %951, %v898
      %v953 = vpop.permute.xlu0 %952
      %956 = vset.pattern.permute.xlu0 0
      %957 = vperm.xlu0 %956, %v899
      %v958 = vpop.permute.xlu0 %957
      %961 = vset.pattern.permute.xlu0 0
      %962 = vperm.xlu0 %961, %v900
      %v963 = vpop.permute.xlu0 %962
      %966 = vset.pattern.permute.xlu0 0
      %967 = vperm.xlu0 %966, %v901
      %v968 = vpop.permute.xlu0 %967
      %971 = vset.pattern.permute.xlu0 0
      %972 = vperm.xlu0 %971, %v902
      %v973 = vpop.permute.xlu0 %972
      %976 = vset.pattern.permute.xlu0 0
      %977 = vperm.xlu0 %976, %v903
      %v978 = vpop.permute.xlu0 %977
      %981 = vset.pattern.permute.xlu0 0
      %982 = vperm.xlu0 %981, %v904
      %v983 = vpop.permute.xlu0 %982
      %v1001 = vunpack.c.l.b16 %v864
      %v1002 = vunpack.c.l.b16 %v865
      %v1003 = vunpack.c.l.b16 %v866
      %v1004 = vunpack.c.l.b16 %v867
      %v1005 = vunpack.c.l.b16 %v868
      %v1006 = vunpack.c.l.b16 %v869
      %v1007 = vunpack.c.l.b16 %v870
      %v1008 = vunpack.c.l.b16 %v871
      %v1009 = vunpack.c.l.b16 %v872
      %v1010 = vunpack.c.l.b16 %v873
      %v1011 = vunpack.c.l.b16 %v874
      %v1012 = vunpack.c.l.b16 %v875
      %v1013 = vunpack.c.l.b16 %v876
      %v1014 = vunpack.c.l.b16 %v877
      %v1015 = vunpack.c.l.b16 %v878
      %v1016 = vunpack.c.l.b16 %v879
      %v1017 = vpack.c.b16 %v1002, %v1001
      %v1018 = vpack.c.b16 %v1004, %v1003
      %v1019 = vpack.c.b16 %v1006, %v1005
      %v1020 = vpack.c.b16 %v1008, %v1007
      %v1021 = vpack.c.b16 %v1010, %v1009
      %v1022 = vpack.c.b16 %v1012, %v1011
      %v1023 = vpack.c.b16 %v1014, %v1013
      %v1024 = vpack.c.b16 %v1016, %v1015
      %1033 = vmatprep.subr.bf16.mxu0 0
      %1034 = vmatpush1.bf16.msra.mxu0 %v880
      %1035 = vmatprep.subr.bf16.mxu0 0
      %1036 = vmatpush1.bf16.msra.mxu0 %v881
      %1037 = vmatprep.subr.bf16.mxu0 0
      %1038 = vmatpush1.bf16.msra.mxu0 %v882
      %1039 = vmatprep.subr.bf16.mxu0 0
      %1040 = vmatpush1.bf16.msra.mxu0 %v883
      %1041 = vmatprep.subr.bf16.mxu0 0
      %1042 = vmatpush1.bf16.msra.mxu0 %v884
      %1043 = vmatprep.subr.bf16.mxu0 0
      %1044 = vmatpush1.bf16.msra.mxu0 %v885
      %1045 = vmatprep.subr.bf16.mxu0 0
      %1046 = vmatpush1.bf16.msra.mxu0 %v886
      %1047 = vmatprep.subr.bf16.mxu0 0
      %1048 = vmatpush1.bf16.msra.mxu0 %v887
      %1049 = vmatprep.subr.bf16.mxu0 0
      %1050 = vmatpush1.bf16.msra.mxu0 0
      %1051 = vmatprep.subr.bf16.mxu0 0
      %1052 = vmatpush1.bf16.msra.mxu0 0
      %1053 = vmatprep.subr.bf16.mxu0 0
      %1054 = vmatpush1.bf16.msra.mxu0 0
      %1055 = vmatprep.subr.bf16.mxu0 0
      %1056 = vmatpush1.bf16.msra.mxu0 0
      %1057 = vmatprep.subr.bf16.mxu0 0
      %1058 = vmatpush1.bf16.msra.mxu0 0
      %1059 = vmatprep.subr.bf16.mxu0 0
      %1060 = vmatpush1.bf16.msra.mxu0 0
      %1061 = vmatprep.subr.bf16.mxu0 0
      %1062 = vmatpush1.bf16.msra.mxu0 0
      %1063 = vmatprep.subr.bf16.mxu0 0
      %1064 = vmatpush1.bf16.msra.mxu0 0
      %1065 = vmatprep.mubr.bf16.mxu0 0
      %1066 = vmatmul.mubr.bf16.gmra.mrb[0].mxu0 %v1017
      %v1067 = vpop.f32.mrb[0].mxu0
      %v1068 = vadd.f32 %v908, %v1067
      %v1069 = vpop.f32.mrb[0].mxu0
      %v1070 = vpop.f32.mrb[0].mxu0
      %v1071 = vadd.f32 %v913, %v1070
      %v1072 = vpop.f32.mrb[0].mxu0
      %1073 = vmatprep.mubr.bf16.mxu0 0
      %1074 = vmatmul.mubr.bf16.gmra.mrb[0].mxu0 %v1018
      %v1075 = vpop.f32.mrb[0].mxu0
      %v1076 = vadd.f32 %v918, %v1075
      %v1077 = vpop.f32.mrb[0].mxu0
      %v1078 = vpop.f32.mrb[0].mxu0
      %v1079 = vadd.f32 %v923, %v1078
      %v1080 = vpop.f32.mrb[0].mxu0
      %1081 = vmatprep.mubr.bf16.mxu0 0
      %1082 = vmatmul.mubr.bf16.gmra.mrb[0].mxu0 %v1019
      %v1083 = vpop.f32.mrb[0].mxu0
      %v1084 = vadd.f32 %v928, %v1083
      %v1085 = vpop.f32.mrb[0].mxu0
      %v1086 = vpop.f32.mrb[0].mxu0
      %v1087 = vadd.f32 %v933, %v1086
      %v1088 = vpop.f32.mrb[0].mxu0
      %1089 = vmatprep.mubr.bf16.mxu0 0
      %1090 = vmatmul.mubr.bf16.gmra.mrb[0].mxu0 %v1020
      %v1091 = vpop.f32.mrb[0].mxu0
      %v1092 = vadd.f32 %v938, %v1091
      %v1093 = vpop.f32.mrb[0].mxu0
      %v1094 = vpop.f32.mrb[0].mxu0
      %v1095 = vadd.f32 %v943, %v1094
      %v1096 = vpop.f32.mrb[0].mxu0
      %1097 = vmatprep.mubr.bf16.mxu0 0
      %1098 = vmatmul.mubr.bf16.gmra.mrb[0].mxu0 %v1021
      %v1099 = vpop.f32.mrb[0].mxu0
      %v1100 = vadd.f32 %v948, %v1099
      %v1101 = vpop.f32.mrb[0].mxu0
      %v1102 = vpop.f32.mrb[0].mxu0
      %v1103 = vadd.f32 %v953, %v1102
      %v1104 = vpop.f32.mrb[0].mxu0
      %1105 = vmatprep.mubr.bf16.mxu0 0
      %1106 = vmatmul.mubr.bf16.gmra.mrb[0].mxu0 %v1022
      %v1107 = vpop.f32.mrb[0].mxu0
      %v1108 = vadd.f32 %v958, %v1107
      %v1109 = vpop.f32.mrb[0].mxu0
      %v1110 = vpop.f32.mrb[0].mxu0
      %v1111 = vadd.f32 %v963, %v1110
      %v1112 = vpop.f32.mrb[0].mxu0
      %1113 = vmatprep.mubr.bf16.mxu0 0
      %1114 = vmatmul.mubr.bf16.gmra.mrb[0].mxu0 %v1023
      %v1115 = vpop.f32.mrb[0].mxu0
      %v1116 = vadd.f32 %v968, %v1115
      %v1117 = vpop.f32.mrb[0].mxu0
      %v1118 = vpop.f32.mrb[0].mxu0
      %v1119 = vadd.f32 %v973, %v1118
      %v1120 = vpop.f32.mrb[0].mxu0
      %1121 = vmatprep.mubr.bf16.mxu0 0
      %1122 = vmatmul.mubr.bf16.gmra.mrb[0].mxu0 %v1024
      %v1123 = vpop.f32.mrb[0].mxu0
      %v1124 = vadd.f32 %v978, %v1123
      %v1125 = vpop.f32.mrb[0].mxu0
      %v1126 = vpop.f32.mrb[0].mxu0
      %v1127 = vadd.f32 %v983, %v1126
      %v1128 = vpop.f32.mrb[0].mxu0
      %1129 = vdwg.mxu0
      %v1130 = vmax.f32 %v1068, 0.0
      %v1131 = vmax.f32 %v1071, 0.0
      %v1132 = vmax.f32 %v1076, 0.0
      %v1133 = vmax.f32 %v1079, 0.0
      %v1134 = vmax.f32 %v1084, 0.0
      %v1135 = vmax.f32 %v1087, 0.0
      %v1136 = vmax.f32 %v1092, 0.0
      %v1137 = vmax.f32 %v1095, 0.0
      %v1138 = vmax.f32 %v1100, 0.0
      %v1139 = vmax.f32 %v1103, 0.0
      %v1140 = vmax.f32 %v1108, 0.0
      %v1141 = vmax.f32 %v1111, 0.0
      %v1142 = vmax.f32 %v1116, 0.0
      %v1143 = vmax.f32 %v1119, 0.0
      %v1144 = vmax.f32 %v1124, 0.0
      %v1145 = vmax.f32 %v1127, 0.0
      %s1146 = scalar_lea.vmem %s3, 128
      %v1147 = vld [vmem:[%s1146] sm:$0xf]
      %v1148 = vld [vmem:[%s1146 + $0x4] sm:$0xf]
      %v1149 = vld [vmem:[%s1146 + $0x8] sm:$0xf]
      %v1150 = vld [vmem:[%s1146 + $0xc] sm:$0xf]
      %v1151 = vld [vmem:[%s1146 + $0x10] sm:$0xf]
      %v1152 = vld [vmem:[%s1146 + $0x14] sm:$0xf]
      %v1153 = vld [vmem:[%s1146 + $0x18] sm:$0xf]
      %v1154 = vld [vmem:[%s1146 + $0x1c] sm:$0xf]
      %v1155 = vld [vmem:[%s1146 + $0x20] sm:$0xf]
      %v1156 = vld [vmem:[%s1146 + $0x24] sm:$0xf]
      %v1157 = vld [vmem:[%s1146 + $0x28] sm:$0xf]
      %v1158 = vld [vmem:[%s1146 + $0x2c] sm:$0xf]
      %v1159 = vld [vmem:[%s1146 + $0x30] sm:$0xf]
      %v1160 = vld [vmem:[%s1146 + $0x34] sm:$0xf]
      %v1161 = vld [vmem:[%s1146 + $0x38] sm:$0xf]
      %v1162 = vld [vmem:[%s1146 + $0x3c] sm:$0xf]
      %v1163 = vpack.c.bf16 %v1131, %v1130
      %v1164 = vpack.c.bf16 %v1133, %v1132
      %v1165 = vpack.c.bf16 %v1135, %v1134
      %v1166 = vpack.c.bf16 %v1137, %v1136
      %v1167 = vpack.c.bf16 %v1139, %v1138
      %v1168 = vpack.c.bf16 %v1141, %v1140
      %v1169 = vpack.c.bf16 %v1143, %v1142
      %v1170 = vpack.c.bf16 %v1145, %v1144
      %s1171 = scalar_lea.vmem %s4, 256
      %v1172 = vld [vmem:[%s1171] sm:$0xff]
      %v1173 = vld [vmem:[%s1171 + $0x8] sm:$0xff]
      %v1174 = vld [vmem:[%s1171 + $0x10] sm:$0xff]
      %v1175 = vld [vmem:[%s1171 + $0x18] sm:$0xff]
      %v1176 = vld [vmem:[%s1171 + $0x20] sm:$0xff]
      %v1177 = vld [vmem:[%s1171 + $0x28] sm:$0xff]
      %v1178 = vld [vmem:[%s1171 + $0x30] sm:$0xff]
      %v1179 = vld [vmem:[%s1171 + $0x38] sm:$0xff]
      %v1180 = vld [vmem:[%s1171 + $0x40] sm:$0xff]
      %v1181 = vld [vmem:[%s1171 + $0x48] sm:$0xff]
      %v1182 = vld [vmem:[%s1171 + $0x50] sm:$0xff]
      %v1183 = vld [vmem:[%s1171 + $0x58] sm:$0xff]
      %v1184 = vld [vmem:[%s1171 + $0x60] sm:$0xff]
      %v1185 = vld [vmem:[%s1171 + $0x68] sm:$0xff]
      %v1186 = vld [vmem:[%s1171 + $0x70] sm:$0xff]
      %v1187 = vld [vmem:[%s1171 + $0x78] sm:$0xff]
      %1189 = vset.pattern.permute.xlu0 0
      %1190 = vperm.xlu0 %1189, %v1172
      %v1191 = vpop.permute.xlu0 %1190
      %1194 = vset.pattern.permute.xlu0 0
      %1195 = vperm.xlu0 %1194, %v1173
      %v1196 = vpop.permute.xlu0 %1195
      %1199 = vset.pattern.permute.xlu0 0
      %1200 = vperm.xlu0 %1199, %v1174
      %v1201 = vpop.permute.xlu0 %1200
      %1204 = vset.pattern.permute.xlu0 0
      %1205 = vperm.xlu0 %1204, %v1175
      %v1206 = vpop.permute.xlu0 %1205
      %1209 = vset.pattern.permute.xlu0 0
      %1210 = vperm.xlu0 %1209, %v1176
      %v1211 = vpop.permute.xlu0 %1210
      %1214 = vset.pattern.permute.xlu0 0
      %1215 = vperm.xlu0 %1214, %v1177
      %v1216 = vpop.permute.xlu0 %1215
      %1219 = vset.pattern.permute.xlu0 0
      %1220 = vperm.xlu0 %1219, %v1178
      %v1221 = vpop.permute.xlu0 %1220
      %1224 = vset.pattern.permute.xlu0 0
      %1225 = vperm.xlu0 %1224, %v1179
      %v1226 = vpop.permute.xlu0 %1225
      %1229 = vset.pattern.permute.xlu0 0
      %1230 = vperm.xlu0 %1229, %v1180
      %v1231 = vpop.permute.xlu0 %1230
      %1234 = vset.pattern.permute.xlu0 0
      %1235 = vperm.xlu0 %1234, %v1181
      %v1236 = vpop.permute.xlu0 %1235
      %1239 = vset.pattern.permute.xlu0 0
      %1240 = vperm.xlu0 %1239, %v1182
      %v1241 = vpop.permute.xlu0 %1240
      %1244 = vset.pattern.permute.xlu0 0
      %1245 = vperm.xlu0 %1244, %v1183
      %v1246 = vpop.permute.xlu0 %1245
      %1249 = vset.pattern.permute.xlu0 0
      %1250 = vperm.xlu0 %1249, %v1184
      %v1251 = vpop.permute.xlu0 %1250
      %1254 = vset.pattern.permute.xlu0 0
      %1255 = vperm.xlu0 %1254, %v1185
      %v1256 = vpop.permute.xlu0 %1255
      %1259 = vset.pattern.permute.xlu0 0
      %1260 = vperm.xlu0 %1259, %v1186
      %v1261 = vpop.permute.xlu0 %1260
      %1264 = vset.pattern.permute.xlu0 0
      %1265 = vperm.xlu0 %1264, %v1187
      %v1266 = vpop.permute.xlu0 %1265
      %v1284 = vunpack.c.l.b16 %v1147
      %v1285 = vunpack.c.l.b16 %v1148
      %v1286 = vunpack.c.l.b16 %v1149
      %v1287 = vunpack.c.l.b16 %v1150
      %v1288 = vunpack.c.l.b16 %v1151
      %v1289 = vunpack.c.l.b16 %v1152
      %v1290 = vunpack.c.l.b16 %v1153
      %v1291 = vunpack.c.l.b16 %v1154
      %v1292 = vunpack.c.l.b16 %v1155
      %v1293 = vunpack.c.l.b16 %v1156
      %v1294 = vunpack.c.l.b16 %v1157
      %v1295 = vunpack.c.l.b16 %v1158
      %v1296 = vunpack.c.l.b16 %v1159
      %v1297 = vunpack.c.l.b16 %v1160
      %v1298 = vunpack.c.l.b16 %v1161
      %v1299 = vunpack.c.l.b16 %v1162
      %v1300 = vpack.c.b16 %v1285, %v1284
      %v1301 = vpack.c.b16 %v1287, %v1286
      %v1302 = vpack.c.b16 %v1289, %v1288
      %v1303 = vpack.c.b16 %v1291, %v1290
      %v1304 = vpack.c.b16 %v1293, %v1292
      %v1305 = vpack.c.b16 %v1295, %v1294
      %v1306 = vpack.c.b16 %v1297, %v1296
      %v1307 = vpack.c.b16 %v1299, %v1298
      %1316 = vmatprep.subr.bf16.mxu0 0
      %1317 = vmatpush1.bf16.msra.mxu0 %v1163
      %1318 = vmatprep.subr.bf16.mxu0 0
      %1319 = vmatpush1.bf16.msra.mxu0 %v1164
      %1320 = vmatprep.subr.bf16.mxu0 0
      %1321 = vmatpush1.bf16.msra.mxu0 %v1165
      %1322 = vmatprep.subr.bf16.mxu0 0
      %1323 = vmatpush1.bf16.msra.mxu0 %v1166
      %1324 = vmatprep.subr.bf16.mxu0 0
      %1325 = vmatpush1.bf16.msra.mxu0 %v1167
      %1326 = vmatprep.subr.bf16.mxu0 0
      %1327 = vmatpush1.bf16.msra.mxu0 %v1168
      %1328 = vmatprep.subr.bf16.mxu0 0
      %1329 = vmatpush1.bf16.msra.mxu0 %v1169
      %1330 = vmatprep.subr.bf16.mxu0 0
      %1331 = vmatpush1.bf16.msra.mxu0 %v1170
      %1332 = vmatprep.subr.bf16.mxu0 0
      %1333 = vmatpush1.bf16.msra.mxu0 0
      %1334 = vmatprep.subr.bf16.mxu0 0
      %1335 = vmatpush1.bf16.msra.mxu0 0
      %1336 = vmatprep.subr.bf16.mxu0 0
      %1337 = vmatpush1.bf16.msra.mxu0 0
      %1338 = vmatprep.subr.bf16.mxu0 0
      %1339 = vmatpush1.bf16.msra.mxu0 0
      %1340 = vmatprep.subr.bf16.mxu0 0
      %1341 = vmatpush1.bf16.msra.mxu0 0
      %1342 = vmatprep.subr.bf16.mxu0 0
      %1343 = vmatpush1.bf16.msra.mxu0 0
      %1344 = vmatprep.subr.bf16.mxu0 0
      %1345 = vmatpush1.bf16.msra.mxu0 0
      %1346 = vmatprep.subr.bf16.mxu0 0
      %1347 = vmatpush1.bf16.msra.mxu0 0
      %1348 = vmatprep.mubr.bf16.mxu0 0
      %1349 = vmatmul.mubr.bf16.gmra.mrb[0].mxu0 %v1300
      %v1350 = vpop.f32.mrb[0].mxu0
      %v1351 = vadd.f32 %v1191, %v1350
      %v1352 = vpop.f32.mrb[0].mxu0
      %v1353 = vpop.f32.mrb[0].mxu0
      %v1354 = vadd.f32 %v1196, %v1353
      %v1355 = vpop.f32.mrb[0].mxu0
      %1356 = vmatprep.mubr.bf16.mxu0 0
      %1357 = vmatmul.mubr.bf16.gmra.mrb[0].mxu0 %v1301
      %v1358 = vpop.f32.mrb[0].mxu0
      %v1359 = vadd.f32 %v1201, %v1358
      %v1360 = vpop.f32.mrb[0].mxu0
      %v1361 = vpop.f32.mrb[0].mxu0
      %v1362 = vadd.f32 %v1206, %v1361
      %v1363 = vpop.f32.mrb[0].mxu0
      %1364 = vmatprep.mubr.bf16.mxu0 0
      %1365 = vmatmul.mubr.bf16.gmra.mrb[0].mxu0 %v1302
      %v1366 = vpop.f32.mrb[0].mxu0
      %v1367 = vadd.f32 %v1211, %v1366
      %v1368 = vpop.f32.mrb[0].mxu0
      %v1369 = vpop.f32.mrb[0].mxu0
      %v1370 = vadd.f32 %v1216, %v1369
      %v1371 = vpop.f32.mrb[0].mxu0
      %1372 = vmatprep.mubr.bf16.mxu0 0
      %1373 = vmatmul.mubr.bf16.gmra.mrb[0].mxu0 %v1303
      %v1374 = vpop.f32.mrb[0].mxu0
      %v1375 = vadd.f32 %v1221, %v1374
      %v1376 = vpop.f32.mrb[0].mxu0
      %v1377 = vpop.f32.mrb[0].mxu0
      %v1378 = vadd.f32 %v1226, %v1377
      %v1379 = vpop.f32.mrb[0].mxu0
      %1380 = vmatprep.mubr.bf16.mxu0 0
      %1381 = vmatmul.mubr.bf16.gmra.mrb[0].mxu0 %v1304
      %v1382 = vpop.f32.mrb[0].mxu0
      %v1383 = vadd.f32 %v1231, %v1382
      %v1384 = vpop.f32.mrb[0].mxu0
      %v1385 = vpop.f32.mrb[0].mxu0
      %v1386 = vadd.f32 %v1236, %v1385
      %v1387 = vpop.f32.mrb[0].mxu0
      %1388 = vmatprep.mubr.bf16.mxu0 0
      %1389 = vmatmul.mubr.bf16.gmra.mrb[0].mxu0 %v1305
      %v1390 = vpop.f32.mrb[0].mxu0
      %v1391 = vadd.f32 %v1241, %v1390
      %v1392 = vpop.f32.mrb[0].mxu0
      %v1393 = vpop.f32.mrb[0].mxu0
      %v1394 = vadd.f32 %v1246, %v1393
      %v1395 = vpop.f32.mrb[0].mxu0
      %1396 = vmatprep.mubr.bf16.mxu0 0
      %1397 = vmatmul.mubr.bf16.gmra.mrb[0].mxu0 %v1306
      %v1398 = vpop.f32.mrb[0].mxu0
      %v1399 = vadd.f32 %v1251, %v1398
      %v1400 = vpop.f32.mrb[0].mxu0
      %v1401 = vpop.f32.mrb[0].mxu0
      %v1402 = vadd.f32 %v1256, %v1401
      %v1403 = vpop.f32.mrb[0].mxu0
      %1404 = vmatprep.mubr.bf16.mxu0 0
      %1405 = vmatmul.mubr.bf16.gmra.mrb[0].mxu0 %v1307
      %v1406 = vpop.f32.mrb[0].mxu0
      %v1407 = vadd.f32 %v1261, %v1406
      %v1408 = vpop.f32.mrb[0].mxu0
      %v1409 = vpop.f32.mrb[0].mxu0
      %v1410 = vadd.f32 %v1266, %v1409
      %v1411 = vpop.f32.mrb[0].mxu0
      %1412 = vdwg.mxu0
      %v1413 = vmax.f32 %v1351, 0.0
      %v1414 = vmax.f32 %v1354, 0.0
      %v1415 = vmax.f32 %v1359, 0.0
      %v1416 = vmax.f32 %v1362, 0.0
      %v1417 = vmax.f32 %v1367, 0.0
      %v1418 = vmax.f32 %v1370, 0.0
      %v1419 = vmax.f32 %v1375, 0.0
      %v1420 = vmax.f32 %v1378, 0.0
      %v1421 = vmax.f32 %v1383, 0.0
      %v1422 = vmax.f32 %v1386, 0.0
      %v1423 = vmax.f32 %v1391, 0.0
      %v1424 = vmax.f32 %v1394, 0.0
      %v1425 = vmax.f32 %v1399, 0.0
      %v1426 = vmax.f32 %v1402, 0.0
      %v1427 = vmax.f32 %v1407, 0.0
      %v1428 = vmax.f32 %v1410, 0.0
      %s1429 = scalar_lea.vmem %s3, 192
      %v1430 = vld [vmem:[%s1429] sm:$0xf]
      %v1431 = vld [vmem:[%s1429 + $0x4] sm:$0xf]
      %v1432 = vld [vmem:[%s1429 + $0x8] sm:$0xf]
      %v1433 = vld [vmem:[%s1429 + $0xc] sm:$0xf]
      %v1434 = vld [vmem:[%s1429 + $0x10] sm:$0xf]
      %v1435 = vld [vmem:[%s1429 + $0x14] sm:$0xf]
      %v1436 = vld [vmem:[%s1429 + $0x18] sm:$0xf]
      %v1437 = vld [vmem:[%s1429 + $0x1c] sm:$0xf]
      %v1438 = vld [vmem:[%s1429 + $0x20] sm:$0xf]
      %v1439 = vld [vmem:[%s1429 + $0x24] sm:$0xf]
      %v1440 = vld [vmem:[%s1429 + $0x28] sm:$0xf]
      %v1441 = vld [vmem:[%s1429 + $0x2c] sm:$0xf]
      %v1442 = vld [vmem:[%s1429 + $0x30] sm:$0xf]
      %v1443 = vld [vmem:[%s1429 + $0x34] sm:$0xf]
      %v1444 = vld [vmem:[%s1429 + $0x38] sm:$0xf]
      %v1445 = vld [vmem:[%s1429 + $0x3c] sm:$0xf]
      %v1446 = vpack.c.bf16 %v1414, %v1413
      %v1447 = vpack.c.bf16 %v1416, %v1415
      %v1448 = vpack.c.bf16 %v1418, %v1417
      %v1449 = vpack.c.bf16 %v1420, %v1419
      %v1450 = vpack.c.bf16 %v1422, %v1421
      %v1451 = vpack.c.bf16 %v1424, %v1423
      %v1452 = vpack.c.bf16 %v1426, %v1425
      %v1453 = vpack.c.bf16 %v1428, %v1427
      %s1454 = scalar_lea.vmem %s4, 384
      %v1455 = vld [vmem:[%s1454] sm:$0xff]
      %v1456 = vld [vmem:[%s1454 + $0x8] sm:$0xff]
      %v1457 = vld [vmem:[%s1454 + $0x10] sm:$0xff]
      %v1458 = vld [vmem:[%s1454 + $0x18] sm:$0xff]
      %v1459 = vld [vmem:[%s1454 + $0x20] sm:$0xff]
      %v1460 = vld [vmem:[%s1454 + $0x28] sm:$0xff]
      %v1461 = vld [vmem:[%s1454 + $0x30] sm:$0xff]
      %v1462 = vld [vmem:[%s1454 + $0x38] sm:$0xff]
      %v1463 = vld [vmem:[%s1454 + $0x40] sm:$0xff]
      %v1464 = vld [vmem:[%s1454 + $0x48] sm:$0xff]
      %v1465 = vld [vmem:[%s1454 + $0x50] sm:$0xff]
      %v1466 = vld [vmem:[%s1454 + $0x58] sm:$0xff]
      %v1467 = vld [vmem:[%s1454 + $0x60] sm:$0xff]
      %v1468 = vld [vmem:[%s1454 + $0x68] sm:$0xff]
      %v1469 = vld [vmem:[%s1454 + $0x70] sm:$0xff]
      %v1470 = vld [vmem:[%s1454 + $0x78] sm:$0xff]
      %1472 = vset.pattern.permute.xlu0 0
      %1473 = vperm.xlu0 %1472, %v1455
      %v1474 = vpop.permute.xlu0 %1473
      %1477 = vset.pattern.permute.xlu0 0
      %1478 = vperm.xlu0 %1477, %v1456
      %v1479 = vpop.permute.xlu0 %1478
      %1482 = vset.pattern.permute.xlu0 0
      %1483 = vperm.xlu0 %1482, %v1457
      %v1484 = vpop.permute.xlu0 %1483
      %1487 = vset.pattern.permute.xlu0 0
      %1488 = vperm.xlu0 %1487, %v1458
      %v1489 = vpop.permute.xlu0 %1488
      %1492 = vset.pattern.permute.xlu0 0
      %1493 = vperm.xlu0 %1492, %v1459
      %v1494 = vpop.permute.xlu0 %1493
      %1497 = vset.pattern.permute.xlu0 0
      %1498 = vperm.xlu0 %1497, %v1460
      %v1499 = vpop.permute.xlu0 %1498
      %1502 = vset.pattern.permute.xlu0 0
      %1503 = vperm.xlu0 %1502, %v1461
      %v1504 = vpop.permute.xlu0 %1503
      %1507 = vset.pattern.permute.xlu0 0
      %1508 = vperm.xlu0 %1507, %v1462
      %v1509 = vpop.permute.xlu0 %1508
      %1512 = vset.pattern.permute.xlu0 0
      %1513 = vperm.xlu0 %1512, %v1463
      %v1514 = vpop.permute.xlu0 %1513
      %1517 = vset.pattern.permute.xlu0 0
      %1518 = vperm.xlu0 %1517, %v1464
      %v1519 = vpop.permute.xlu0 %1518
      %1522 = vset.pattern.permute.xlu0 0
      %1523 = vperm.xlu0 %1522, %v1465
      %v1524 = vpop.permute.xlu0 %1523
      %1527 = vset.pattern.permute.xlu0 0
      %1528 = vperm.xlu0 %1527, %v1466
      %v1529 = vpop.permute.xlu0 %1528
      %1532 = vset.pattern.permute.xlu0 0
      %1533 = vperm.xlu0 %1532, %v1467
      %v1534 = vpop.permute.xlu0 %1533
      %1537 = vset.pattern.permute.xlu0 0
      %1538 = vperm.xlu0 %1537, %v1468
      %v1539 = vpop.permute.xlu0 %1538
      %1542 = vset.pattern.permute.xlu0 0
      %1543 = vperm.xlu0 %1542, %v1469
      %v1544 = vpop.permute.xlu0 %1543
      %1547 = vset.pattern.permute.xlu0 0
      %1548 = vperm.xlu0 %1547, %v1470
      %v1549 = vpop.permute.xlu0 %1548
      %v1567 = vunpack.c.l.b16 %v1430
      %v1568 = vunpack.c.l.b16 %v1431
      %v1569 = vunpack.c.l.b16 %v1432
      %v1570 = vunpack.c.l.b16 %v1433
      %v1571 = vunpack.c.l.b16 %v1434
      %v1572 = vunpack.c.l.b16 %v1435
      %v1573 = vunpack.c.l.b16 %v1436
      %v1574 = vunpack.c.l.b16 %v1437
      %v1575 = vunpack.c.l.b16 %v1438
      %v1576 = vunpack.c.l.b16 %v1439
      %v1577 = vunpack.c.l.b16 %v1440
      %v1578 = vunpack.c.l.b16 %v1441
      %v1579 = vunpack.c.l.b16 %v1442
      %v1580 = vunpack.c.l.b16 %v1443
      %v1581 = vunpack.c.l.b16 %v1444
      %v1582 = vunpack.c.l.b16 %v1445
      %v1583 = vpack.c.b16 %v1568, %v1567
      %v1584 = vpack.c.b16 %v1570, %v1569
      %v1585 = vpack.c.b16 %v1572, %v1571
      %v1586 = vpack.c.b16 %v1574, %v1573
      %v1587 = vpack.c.b16 %v1576, %v1575
      %v1588 = vpack.c.b16 %v1578, %v1577
      %v1589 = vpack.c.b16 %v1580, %v1579
      %v1590 = vpack.c.b16 %v1582, %v1581
      %1599 = vmatprep.subr.bf16.mxu0 0
      %1600 = vmatpush1.bf16.msra.mxu0 %v1446
      %1601 = vmatprep.subr.bf16.mxu0 0
      %1602 = vmatpush1.bf16.msra.mxu0 %v1447
      %1603 = vmatprep.subr.bf16.mxu0 0
      %1604 = vmatpush1.bf16.msra.mxu0 %v1448
      %1605 = vmatprep.subr.bf16.mxu0 0
      %1606 = vmatpush1.bf16.msra.mxu0 %v1449
      %1607 = vmatprep.subr.bf16.mxu0 0
      %1608 = vmatpush1.bf16.msra.mxu0 %v1450
      %1609 = vmatprep.subr.bf16.mxu0 0
      %1610 = vmatpush1.bf16.msra.mxu0 %v1451
      %1611 = vmatprep.subr.bf16.mxu0 0
      %1612 = vmatpush1.bf16.msra.mxu0 %v1452
      %1613 = vmatprep.subr.bf16.mxu0 0
      %1614 = vmatpush1.bf16.msra.mxu0 %v1453
      %1615 = vmatprep.subr.bf16.mxu0 0
      %1616 = vmatpush1.bf16.msra.mxu0 0
      %1617 = vmatprep.subr.bf16.mxu0 0
      %1618 = vmatpush1.bf16.msra.mxu0 0
      %1619 = vmatprep.subr.bf16.mxu0 0
      %1620 = vmatpush1.bf16.msra.mxu0 0
      %1621 = vmatprep.subr.bf16.mxu0 0
      %1622 = vmatpush1.bf16.msra.mxu0 0
      %1623 = vmatprep.subr.bf16.mxu0 0
      %1624 = vmatpush1.bf16.msra.mxu0 0
      %1625 = vmatprep.subr.bf16.mxu0 0
      %1626 = vmatpush1.bf16.msra.mxu0 0
      %1627 = vmatprep.subr.bf16.mxu0 0
      %1628 = vmatpush1.bf16.msra.mxu0 0
      %1629 = vmatprep.subr.bf16.mxu0 0
      %1630 = vmatpush1.bf16.msra.mxu0 0
      %1631 = vmatprep.mubr.bf16.mxu0 0
      %1632 = vmatmul.mubr.bf16.gmra.mrb[0].mxu0 %v1583
      %v1633 = vpop.f32.mrb[0].mxu0
      %v1634 = vadd.f32 %v1474, %v1633
      %v1635 = vpop.f32.mrb[0].mxu0
      %v1636 = vpop.f32.mrb[0].mxu0
      %v1637 = vadd.f32 %v1479, %v1636
      %v1638 = vpop.f32.mrb[0].mxu0
      %1639 = vmatprep.mubr.bf16.mxu0 0
      %1640 = vmatmul.mubr.bf16.gmra.mrb[0].mxu0 %v1584
      %v1641 = vpop.f32.mrb[0].mxu0
      %v1642 = vadd.f32 %v1484, %v1641
      %v1643 = vpop.f32.mrb[0].mxu0
      %v1644 = vpop.f32.mrb[0].mxu0
      %v1645 = vadd.f32 %v1489, %v1644
      %v1646 = vpop.f32.mrb[0].mxu0
      %1647 = vmatprep.mubr.bf16.mxu0 0
      %1648 = vmatmul.mubr.bf16.gmra.mrb[0].mxu0 %v1585
      %v1649 = vpop.f32.mrb[0].mxu0
      %v1650 = vadd.f32 %v1494, %v1649
      %v1651 = vpop.f32.mrb[0].mxu0
      %v1652 = vpop.f32.mrb[0].mxu0
      %v1653 = vadd.f32 %v1499, %v1652
      %v1654 = vpop.f32.mrb[0].mxu0
      %1655 = vmatprep.mubr.bf16.mxu0 0
      %1656 = vmatmul.mubr.bf16.gmra.mrb[0].mxu0 %v1586
      %v1657 = vpop.f32.mrb[0].mxu0
      %v1658 = vadd.f32 %v1504, %v1657
      %v1659 = vpop.f32.mrb[0].mxu0
      %v1660 = vpop.f32.mrb[0].mxu0
      %v1661 = vadd.f32 %v1509, %v1660
      %v1662 = vpop.f32.mrb[0].mxu0
      %1663 = vmatprep.mubr.bf16.mxu0 0
      %1664 = vmatmul.mubr.bf16.gmra.mrb[0].mxu0 %v1587
      %v1665 = vpop.f32.mrb[0].mxu0
      %v1666 = vadd.f32 %v1514, %v1665
      %v1667 = vpop.f32.mrb[0].mxu0
      %v1668 = vpop.f32.mrb[0].mxu0
      %v1669 = vadd.f32 %v1519, %v1668
      %v1670 = vpop.f32.mrb[0].mxu0
      %1671 = vmatprep.mubr.bf16.mxu0 0
      %1672 = vmatmul.mubr.bf16.gmra.mrb[0].mxu0 %v1588
      %v1673 = vpop.f32.mrb[0].mxu0
      %v1674 = vadd.f32 %v1524, %v1673
      %v1675 = vpop.f32.mrb[0].mxu0
      %v1676 = vpop.f32.mrb[0].mxu0
      %v1677 = vadd.f32 %v1529, %v1676
      %v1678 = vpop.f32.mrb[0].mxu0
      %1679 = vmatprep.mubr.bf16.mxu0 0
      %1680 = vmatmul.mubr.bf16.gmra.mrb[0].mxu0 %v1589
      %v1681 = vpop.f32.mrb[0].mxu0
      %v1682 = vadd.f32 %v1534, %v1681
      %v1683 = vpop.f32.mrb[0].mxu0
      %v1684 = vpop.f32.mrb[0].mxu0
      %v1685 = vadd.f32 %v1539, %v1684
      %v1686 = vpop.f32.mrb[0].mxu0
      %1687 = vmatprep.mubr.bf16.mxu0 0
      %1688 = vmatmul.mubr.bf16.gmra.mrb[0].mxu0 %v1590
      %v1689 = vpop.f32.mrb[0].mxu0
      %v1690 = vadd.f32 %v1544, %v1689
      %v1691 = vpop.f32.mrb[0].mxu0
      %v1692 = vpop.f32.mrb[0].mxu0
      %v1693 = vadd.f32 %v1549, %v1692
      %v1694 = vpop.f32.mrb[0].mxu0
      %1695 = vdwg.mxu0
      %v1696 = vmax.f32 %v1634, 0.0
      %v1697 = vmax.f32 %v1637, 0.0
      %v1698 = vmax.f32 %v1642, 0.0
      %v1699 = vmax.f32 %v1645, 0.0
      %v1700 = vmax.f32 %v1650, 0.0
      %v1701 = vmax.f32 %v1653, 0.0
      %v1702 = vmax.f32 %v1658, 0.0
      %v1703 = vmax.f32 %v1661, 0.0
      %v1704 = vmax.f32 %v1666, 0.0
      %v1705 = vmax.f32 %v1669, 0.0
      %v1706 = vmax.f32 %v1674, 0.0
      %v1707 = vmax.f32 %v1677, 0.0
      %v1708 = vmax.f32 %v1682, 0.0
      %v1709 = vmax.f32 %v1685, 0.0
      %v1710 = vmax.f32 %v1690, 0.0
      %v1711 = vmax.f32 %v1693, 0.0
      %s1712 = scalar_lea.vmem %s3, 256
      %v1713 = vld [vmem:[%s1712] sm:$0xf]
      %v1714 = vld [vmem:[%s1712 + $0x4] sm:$0xf]
      %v1715 = vld [vmem:[%s1712 + $0x8] sm:$0xf]
      %v1716 = vld [vmem:[%s1712 + $0xc] sm:$0xf]
      %v1717 = vld [vmem:[%s1712 + $0x10] sm:$0xf]
      %v1718 = vld [vmem:[%s1712 + $0x14] sm:$0xf]
      %v1719 = vld [vmem:[%s1712 + $0x18] sm:$0xf]
      %v1720 = vld [vmem:[%s1712 + $0x1c] sm:$0xf]
      %v1721 = vld [vmem:[%s1712 + $0x20] sm:$0xf]
      %v1722 = vld [vmem:[%s1712 + $0x24] sm:$0xf]
      %v1723 = vld [vmem:[%s1712 + $0x28] sm:$0xf]
      %v1724 = vld [vmem:[%s1712 + $0x2c] sm:$0xf]
      %v1725 = vld [vmem:[%s1712 + $0x30] sm:$0xf]
      %v1726 = vld [vmem:[%s1712 + $0x34] sm:$0xf]
      %v1727 = vld [vmem:[%s1712 + $0x38] sm:$0xf]
      %v1728 = vld [vmem:[%s1712 + $0x3c] sm:$0xf]
      %v1729 = vpack.c.bf16 %v1697, %v1696
      %v1730 = vpack.c.bf16 %v1699, %v1698
      %v1731 = vpack.c.bf16 %v1701, %v1700
      %v1732 = vpack.c.bf16 %v1703, %v1702
      %v1733 = vpack.c.bf16 %v1705, %v1704
      %v1734 = vpack.c.bf16 %v1707, %v1706
      %v1735 = vpack.c.bf16 %v1709, %v1708
      %v1736 = vpack.c.bf16 %v1711, %v1710
      %s1737 = scalar_lea.vmem %s4, 512
      %v1738 = vld [vmem:[%s1737] sm:$0xff]
      %v1739 = vld [vmem:[%s1737 + $0x8] sm:$0xff]
      %v1740 = vld [vmem:[%s1737 + $0x10] sm:$0xff]
      %v1741 = vld [vmem:[%s1737 + $0x18] sm:$0xff]
      %v1742 = vld [vmem:[%s1737 + $0x20] sm:$0xff]
      %v1743 = vld [vmem:[%s1737 + $0x28] sm:$0xff]
      %v1744 = vld [vmem:[%s1737 + $0x30] sm:$0xff]
      %v1745 = vld [vmem:[%s1737 + $0x38] sm:$0xff]
      %v1746 = vld [vmem:[%s1737 + $0x40] sm:$0xff]
      %v1747 = vld [vmem:[%s1737 + $0x48] sm:$0xff]
      %v1748 = vld [vmem:[%s1737 + $0x50] sm:$0xff]
      %v1749 = vld [vmem:[%s1737 + $0x58] sm:$0xff]
      %v1750 = vld [vmem:[%s1737 + $0x60] sm:$0xff]
      %v1751 = vld [vmem:[%s1737 + $0x68] sm:$0xff]
      %v1752 = vld [vmem:[%s1737 + $0x70] sm:$0xff]
      %v1753 = vld [vmem:[%s1737 + $0x78] sm:$0xff]
      %1755 = vset.pattern.permute.xlu0 0
      %1756 = vperm.xlu0 %1755, %v1738
      %v1757 = vpop.permute.xlu0 %1756
      %1760 = vset.pattern.permute.xlu0 0
      %1761 = vperm.xlu0 %1760, %v1739
      %v1762 = vpop.permute.xlu0 %1761
      %1765 = vset.pattern.permute.xlu0 0
      %1766 = vperm.xlu0 %1765, %v1740
      %v1767 = vpop.permute.xlu0 %1766
      %1770 = vset.pattern.permute.xlu0 0
      %1771 = vperm.xlu0 %1770, %v1741
      %v1772 = vpop.permute.xlu0 %1771
      %1775 = vset.pattern.permute.xlu0 0
      %1776 = vperm.xlu0 %1775, %v1742
      %v1777 = vpop.permute.xlu0 %1776
      %1780 = vset.pattern.permute.xlu0 0
      %1781 = vperm.xlu0 %1780, %v1743
      %v1782 = vpop.permute.xlu0 %1781
      %1785 = vset.pattern.permute.xlu0 0
      %1786 = vperm.xlu0 %1785, %v1744
      %v1787 = vpop.permute.xlu0 %1786
      %1790 = vset.pattern.permute.xlu0 0
      %1791 = vperm.xlu0 %1790, %v1745
      %v1792 = vpop.permute.xlu0 %1791
      %1795 = vset.pattern.permute.xlu0 0
      %1796 = vperm.xlu0 %1795, %v1746
      %v1797 = vpop.permute.xlu0 %1796
      %1800 = vset.pattern.permute.xlu0 0
      %1801 = vperm.xlu0 %1800, %v1747
      %v1802 = vpop.permute.xlu0 %1801
      %1805 = vset.pattern.permute.xlu0 0
      %1806 = vperm.xlu0 %1805, %v1748
      %v1807 = vpop.permute.xlu0 %1806
      %1810 = vset.pattern.permute.xlu0 0
      %1811 = vperm.xlu0 %1810, %v1749
      %v1812 = vpop.permute.xlu0 %1811
      %1815 = vset.pattern.permute.xlu0 0
      %1816 = vperm.xlu0 %1815, %v1750
      %v1817 = vpop.permute.xlu0 %1816
      %1820 = vset.pattern.permute.xlu0 0
      %1821 = vperm.xlu0 %1820, %v1751
      %v1822 = vpop.permute.xlu0 %1821
      %1825 = vset.pattern.permute.xlu0 0
      %1826 = vperm.xlu0 %1825, %v1752
      %v1827 = vpop.permute.xlu0 %1826
      %1830 = vset.pattern.permute.xlu0 0
      %1831 = vperm.xlu0 %1830, %v1753
      %v1832 = vpop.permute.xlu0 %1831
      %v1850 = vunpack.c.l.b16 %v1713
      %v1851 = vunpack.c.l.b16 %v1714
      %v1852 = vunpack.c.l.b16 %v1715
      %v1853 = vunpack.c.l.b16 %v1716
      %v1854 = vunpack.c.l.b16 %v1717
      %v1855 = vunpack.c.l.b16 %v1718
      %v1856 = vunpack.c.l.b16 %v1719
      %v1857 = vunpack.c.l.b16 %v1720
      %v1858 = vunpack.c.l.b16 %v1721
      %v1859 = vunpack.c.l.b16 %v1722
      %v1860 = vunpack.c.l.b16 %v1723
      %v1861 = vunpack.c.l.b16 %v1724
      %v1862 = vunpack.c.l.b16 %v1725
      %v1863 = vunpack.c.l.b16 %v1726
      %v1864 = vunpack.c.l.b16 %v1727
      %v1865 = vunpack.c.l.b16 %v1728
      %v1866 = vpack.c.b16 %v1851, %v1850
      %v1867 = vpack.c.b16 %v1853, %v1852
      %v1868 = vpack.c.b16 %v1855, %v1854
      %v1869 = vpack.c.b16 %v1857, %v1856
      %v1870 = vpack.c.b16 %v1859, %v1858
      %v1871 = vpack.c.b16 %v1861, %v1860
      %v1872 = vpack.c.b16 %v1863, %v1862
      %v1873 = vpack.c.b16 %v1865, %v1864
      %1882 = vmatprep.subr.bf16.mxu0 0
      %1883 = vmatpush1.bf16.msra.mxu0 %v1729
      %1884 = vmatprep.subr.bf16.mxu0 0
      %1885 = vmatpush1.bf16.msra.mxu0 %v1730
      %1886 = vmatprep.subr.bf16.mxu0 0
      %1887 = vmatpush1.bf16.msra.mxu0 %v1731
      %1888 = vmatprep.subr.bf16.mxu0 0
      %1889 = vmatpush1.bf16.msra.mxu0 %v1732
      %1890 = vmatprep.subr.bf16.mxu0 0
      %1891 = vmatpush1.bf16.msra.mxu0 %v1733
      %1892 = vmatprep.subr.bf16.mxu0 0
      %1893 = vmatpush1.bf16.msra.mxu0 %v1734
      %1894 = vmatprep.subr.bf16.mxu0 0
      %1895 = vmatpush1.bf16.msra.mxu0 %v1735
      %1896 = vmatprep.subr.bf16.mxu0 0
      %1897 = vmatpush1.bf16.msra.mxu0 %v1736
      %1898 = vmatprep.subr.bf16.mxu0 0
      %1899 = vmatpush1.bf16.msra.mxu0 0
      %1900 = vmatprep.subr.bf16.mxu0 0
      %1901 = vmatpush1.bf16.msra.mxu0 0
      %1902 = vmatprep.subr.bf16.mxu0 0
      %1903 = vmatpush1.bf16.msra.mxu0 0
      %1904 = vmatprep.subr.bf16.mxu0 0
      %1905 = vmatpush1.bf16.msra.mxu0 0
      %1906 = vmatprep.subr.bf16.mxu0 0
      %1907 = vmatpush1.bf16.msra.mxu0 0
      %1908 = vmatprep.subr.bf16.mxu0 0
      %1909 = vmatpush1.bf16.msra.mxu0 0
      %1910 = vmatprep.subr.bf16.mxu0 0
      %1911 = vmatpush1.bf16.msra.mxu0 0
      %1912 = vmatprep.subr.bf16.mxu0 0
      %1913 = vmatpush1.bf16.msra.mxu0 0
      %1914 = vmatprep.mubr.bf16.mxu0 0
      %1915 = vmatmul.mubr.bf16.gmra.mrb[0].mxu0 %v1866
      %v1916 = vpop.f32.mrb[0].mxu0
      %v1917 = vadd.f32 %v1757, %v1916
      %v1918 = vpop.f32.mrb[0].mxu0
      %v1919 = vpop.f32.mrb[0].mxu0
      %v1920 = vadd.f32 %v1762, %v1919
      %v1921 = vpop.f32.mrb[0].mxu0
      %1922 = vmatprep.mubr.bf16.mxu0 0
      %1923 = vmatmul.mubr.bf16.gmra.mrb[0].mxu0 %v1867
      %v1924 = vpop.f32.mrb[0].mxu0
      %v1925 = vadd.f32 %v1767, %v1924
      %v1926 = vpop.f32.mrb[0].mxu0
      %v1927 = vpop.f32.mrb[0].mxu0
      %v1928 = vadd.f32 %v1772, %v1927
      %v1929 = vpop.f32.mrb[0].mxu0
      %1930 = vmatprep.mubr.bf16.mxu0 0
      %1931 = vmatmul.mubr.bf16.gmra.mrb[0].mxu0 %v1868
      %v1932 = vpop.f32.mrb[0].mxu0
      %v1933 = vadd.f32 %v1777, %v1932
      %v1934 = vpop.f32.mrb[0].mxu0
      %v1935 = vpop.f32.mrb[0].mxu0
      %v1936 = vadd.f32 %v1782, %v1935
      %v1937 = vpop.f32.mrb[0].mxu0
      %1938 = vmatprep.mubr.bf16.mxu0 0
      %1939 = vmatmul.mubr.bf16.gmra.mrb[0].mxu0 %v1869
      %v1940 = vpop.f32.mrb[0].mxu0
      %v1941 = vadd.f32 %v1787, %v1940
      %v1942 = vpop.f32.mrb[0].mxu0
      %v1943 = vpop.f32.mrb[0].mxu0
      %v1944 = vadd.f32 %v1792, %v1943
      %v1945 = vpop.f32.mrb[0].mxu0
      %1946 = vmatprep.mubr.bf16.mxu0 0
      %1947 = vmatmul.mubr.bf16.gmra.mrb[0].mxu0 %v1870
      %v1948 = vpop.f32.mrb[0].mxu0
      %v1949 = vadd.f32 %v1797, %v1948
      %v1950 = vpop.f32.mrb[0].mxu0
      %v1951 = vpop.f32.mrb[0].mxu0
      %v1952 = vadd.f32 %v1802, %v1951
      %v1953 = vpop.f32.mrb[0].mxu0
      %1954 = vmatprep.mubr.bf16.mxu0 0
      %1955 = vmatmul.mubr.bf16.gmra.mrb[0].mxu0 %v1871
      %v1956 = vpop.f32.mrb[0].mxu0
      %v1957 = vadd.f32 %v1807, %v1956
      %v1958 = vpop.f32.mrb[0].mxu0
      %v1959 = vpop.f32.mrb[0].mxu0
      %v1960 = vadd.f32 %v1812, %v1959
      %v1961 = vpop.f32.mrb[0].mxu0
      %1962 = vmatprep.mubr.bf16.mxu0 0
      %1963 = vmatmul.mubr.bf16.gmra.mrb[0].mxu0 %v1872
      %v1964 = vpop.f32.mrb[0].mxu0
      %v1965 = vadd.f32 %v1817, %v1964
      %v1966 = vpop.f32.mrb[0].mxu0
      %v1967 = vpop.f32.mrb[0].mxu0
      %v1968 = vadd.f32 %v1822, %v1967
      %v1969 = vpop.f32.mrb[0].mxu0
      %1970 = vmatprep.mubr.bf16.mxu0 0
      %1971 = vmatmul.mubr.bf16.gmra.mrb[0].mxu0 %v1873
      %v1972 = vpop.f32.mrb[0].mxu0
      %v1973 = vadd.f32 %v1827, %v1972
      %v1974 = vpop.f32.mrb[0].mxu0
      %v1975 = vpop.f32.mrb[0].mxu0
      %v1976 = vadd.f32 %v1832, %v1975
      %v1977 = vpop.f32.mrb[0].mxu0
      %1978 = vdwg.mxu0
      %v1979 = vmax.f32 %v1917, 0.0
      %v1980 = vmax.f32 %v1920, 0.0
      %v1981 = vmax.f32 %v1925, 0.0
      %v1982 = vmax.f32 %v1928, 0.0
      %v1983 = vmax.f32 %v1933, 0.0
      %v1984 = vmax.f32 %v1936, 0.0
      %v1985 = vmax.f32 %v1941, 0.0
      %v1986 = vmax.f32 %v1944, 0.0
      %v1987 = vmax.f32 %v1949, 0.0
      %v1988 = vmax.f32 %v1952, 0.0
      %v1989 = vmax.f32 %v1957, 0.0
      %v1990 = vmax.f32 %v1960, 0.0
      %v1991 = vmax.f32 %v1965, 0.0
      %v1992 = vmax.f32 %v1968, 0.0
      %v1993 = vmax.f32 %v1973, 0.0
      %v1994 = vmax.f32 %v1976, 0.0
      %s1995 = scalar_lea.vmem %s3, 320
      %v1996 = vld [vmem:[%s1995] sm:$0xf]
      %v1997 = vld [vmem:[%s1995 + $0x4] sm:$0xf]
      %v1998 = vld [vmem:[%s1995 + $0x8] sm:$0xf]
      %v1999 = vld [vmem:[%s1995 + $0xc] sm:$0xf]
      %v2000 = vld [vmem:[%s1995 + $0x10] sm:$0xf]
      %v2001 = vld [vmem:[%s1995 + $0x14] sm:$0xf]
      %v2002 = vld [vmem:[%s1995 + $0x18] sm:$0xf]
      %v2003 = vld [vmem:[%s1995 + $0x1c] sm:$0xf]
      %v2004 = vld [vmem:[%s1995 + $0x20] sm:$0xf]
      %v2005 = vld [vmem:[%s1995 + $0x24] sm:$0xf]
      %v2006 = vld [vmem:[%s1995 + $0x28] sm:$0xf]
      %v2007 = vld [vmem:[%s1995 + $0x2c] sm:$0xf]
      %v2008 = vld [vmem:[%s1995 + $0x30] sm:$0xf]
      %v2009 = vld [vmem:[%s1995 + $0x34] sm:$0xf]
      %v2010 = vld [vmem:[%s1995 + $0x38] sm:$0xf]
      %v2011 = vld [vmem:[%s1995 + $0x3c] sm:$0xf]
      %v2012 = vpack.c.bf16 %v1980, %v1979
      %v2013 = vpack.c.bf16 %v1982, %v1981
      %v2014 = vpack.c.bf16 %v1984, %v1983
      %v2015 = vpack.c.bf16 %v1986, %v1985
      %v2016 = vpack.c.bf16 %v1988, %v1987
      %v2017 = vpack.c.bf16 %v1990, %v1989
      %v2018 = vpack.c.bf16 %v1992, %v1991
      %v2019 = vpack.c.bf16 %v1994, %v1993
      %s2020 = scalar_lea.vmem %s4, 640
      %v2021 = vld [vmem:[%s2020] sm:$0xff]
      %v2022 = vld [vmem:[%s2020 + $0x8] sm:$0xff]
      %v2023 = vld [vmem:[%s2020 + $0x10] sm:$0xff]
      %v2024 = vld [vmem:[%s2020 + $0x18] sm:$0xff]
      %v2025 = vld [vmem:[%s2020 + $0x20] sm:$0xff]
      %v2026 = vld [vmem:[%s2020 + $0x28] sm:$0xff]
      %v2027 = vld [vmem:[%s2020 + $0x30] sm:$0xff]
      %v2028 = vld [vmem:[%s2020 + $0x38] sm:$0xff]
      %v2029 = vld [vmem:[%s2020 + $0x40] sm:$0xff]
      %v2030 = vld [vmem:[%s2020 + $0x48] sm:$0xff]
      %v2031 = vld [vmem:[%s2020 + $0x50] sm:$0xff]
      %v2032 = vld [vmem:[%s2020 + $0x58] sm:$0xff]
      %v2033 = vld [vmem:[%s2020 + $0x60] sm:$0xff]
      %v2034 = vld [vmem:[%s2020 + $0x68] sm:$0xff]
      %v2035 = vld [vmem:[%s2020 + $0x70] sm:$0xff]
      %v2036 = vld [vmem:[%s2020 + $0x78] sm:$0xff]
      %2038 = vset.pattern.permute.xlu0 0
      %2039 = vperm.xlu0 %2038, %v2021
      %v2040 = vpop.permute.xlu0 %2039
      %2043 = vset.pattern.permute.xlu0 0
      %2044 = vperm.xlu0 %2043, %v2022
      %v2045 = vpop.permute.xlu0 %2044
      %2048 = vset.pattern.permute.xlu0 0
      %2049 = vperm.xlu0 %2048, %v2023
      %v2050 = vpop.permute.xlu0 %2049
      %2053 = vset.pattern.permute.xlu0 0
      %2054 = vperm.xlu0 %2053, %v2024
      %v2055 = vpop.permute.xlu0 %2054
      %2058 = vset.pattern.permute.xlu0 0
      %2059 = vperm.xlu0 %2058, %v2025
      %v2060 = vpop.permute.xlu0 %2059
      %2063 = vset.pattern.permute.xlu0 0
      %2064 = vperm.xlu0 %2063, %v2026
      %v2065 = vpop.permute.xlu0 %2064
      %2068 = vset.pattern.permute.xlu0 0
      %2069 = vperm.xlu0 %2068, %v2027
      %v2070 = vpop.permute.xlu0 %2069
      %2073 = vset.pattern.permute.xlu0 0
      %2074 = vperm.xlu0 %2073, %v2028
      %v2075 = vpop.permute.xlu0 %2074
      %2078 = vset.pattern.permute.xlu0 0
      %2079 = vperm.xlu0 %2078, %v2029
      %v2080 = vpop.permute.xlu0 %2079
      %2083 = vset.pattern.permute.xlu0 0
      %2084 = vperm.xlu0 %2083, %v2030
      %v2085 = vpop.permute.xlu0 %2084
      %2088 = vset.pattern.permute.xlu0 0
      %2089 = vperm.xlu0 %2088, %v2031
      %v2090 = vpop.permute.xlu0 %2089
      %2093 = vset.pattern.permute.xlu0 0
      %2094 = vperm.xlu0 %2093, %v2032
      %v2095 = vpop.permute.xlu0 %2094
      %2098 = vset.pattern.permute.xlu0 0
      %2099 = vperm.xlu0 %2098, %v2033
      %v2100 = vpop.permute.xlu0 %2099
      %2103 = vset.pattern.permute.xlu0 0
      %2104 = vperm.xlu0 %2103, %v2034
      %v2105 = vpop.permute.xlu0 %2104
      %2108 = vset.pattern.permute.xlu0 0
      %2109 = vperm.xlu0 %2108, %v2035
      %v2110 = vpop.permute.xlu0 %2109
      %2113 = vset.pattern.permute.xlu0 0
      %2114 = vperm.xlu0 %2113, %v2036
      %v2115 = vpop.permute.xlu0 %2114
      %v2133 = vunpack.c.l.b16 %v1996
      %v2134 = vunpack.c.l.b16 %v1997
      %v2135 = vunpack.c.l.b16 %v1998
      %v2136 = vunpack.c.l.b16 %v1999
      %v2137 = vunpack.c.l.b16 %v2000
      %v2138 = vunpack.c.l.b16 %v2001
      %v2139 = vunpack.c.l.b16 %v2002
      %v2140 = vunpack.c.l.b16 %v2003
      %v2141 = vunpack.c.l.b16 %v2004
      %v2142 = vunpack.c.l.b16 %v2005
      %v2143 = vunpack.c.l.b16 %v2006
      %v2144 = vunpack.c.l.b16 %v2007
      %v2145 = vunpack.c.l.b16 %v2008
      %v2146 = vunpack.c.l.b16 %v2009
      %v2147 = vunpack.c.l.b16 %v2010
      %v2148 = vunpack.c.l.b16 %v2011
      %v2149 = vpack.c.b16 %v2134, %v2133
      %v2150 = vpack.c.b16 %v2136, %v2135
      %v2151 = vpack.c.b16 %v2138, %v2137
      %v2152 = vpack.c.b16 %v2140, %v2139
      %v2153 = vpack.c.b16 %v2142, %v2141
      %v2154 = vpack.c.b16 %v2144, %v2143
      %v2155 = vpack.c.b16 %v2146, %v2145
      %v2156 = vpack.c.b16 %v2148, %v2147
      %2165 = vmatprep.subr.bf16.mxu0 0
      %2166 = vmatpush1.bf16.msra.mxu0 %v2012
      %2167 = vmatprep.subr.bf16.mxu0 0
      %2168 = vmatpush1.bf16.msra.mxu0 %v2013
      %2169 = vmatprep.subr.bf16.mxu0 0
      %2170 = vmatpush1.bf16.msra.mxu0 %v2014
      %2171 = vmatprep.subr.bf16.mxu0 0
      %2172 = vmatpush1.bf16.msra.mxu0 %v2015
      %2173 = vmatprep.subr.bf16.mxu0 0
      %2174 = vmatpush1.bf16.msra.mxu0 %v2016
      %2175 = vmatprep.subr.bf16.mxu0 0
      %2176 = vmatpush1.bf16.msra.mxu0 %v2017
      %2177 = vmatprep.subr.bf16.mxu0 0
      %2178 = vmatpush1.bf16.msra.mxu0 %v2018
      %2179 = vmatprep.subr.bf16.mxu0 0
      %2180 = vmatpush1.bf16.msra.mxu0 %v2019
      %2181 = vmatprep.subr.bf16.mxu0 0
      %2182 = vmatpush1.bf16.msra.mxu0 0
      %2183 = vmatprep.subr.bf16.mxu0 0
      %2184 = vmatpush1.bf16.msra.mxu0 0
      %2185 = vmatprep.subr.bf16.mxu0 0
      %2186 = vmatpush1.bf16.msra.mxu0 0
      %2187 = vmatprep.subr.bf16.mxu0 0
      %2188 = vmatpush1.bf16.msra.mxu0 0
      %2189 = vmatprep.subr.bf16.mxu0 0
      %2190 = vmatpush1.bf16.msra.mxu0 0
      %2191 = vmatprep.subr.bf16.mxu0 0
      %2192 = vmatpush1.bf16.msra.mxu0 0
      %2193 = vmatprep.subr.bf16.mxu0 0
      %2194 = vmatpush1.bf16.msra.mxu0 0
      %2195 = vmatprep.subr.bf16.mxu0 0
      %2196 = vmatpush1.bf16.msra.mxu0 0
      %2197 = vmatprep.mubr.bf16.mxu0 0
      %2198 = vmatmul.mubr.bf16.gmra.mrb[0].mxu0 %v2149
      %v2199 = vpop.f32.mrb[0].mxu0
      %v2200 = vadd.f32 %v2040, %v2199
      %v2201 = vpop.f32.mrb[0].mxu0
      %v2202 = vpop.f32.mrb[0].mxu0
      %v2203 = vadd.f32 %v2045, %v2202
      %v2204 = vpop.f32.mrb[0].mxu0
      %2205 = vmatprep.mubr.bf16.mxu0 0
      %2206 = vmatmul.mubr.bf16.gmra.mrb[0].mxu0 %v2150
      %v2207 = vpop.f32.mrb[0].mxu0
      %v2208 = vadd.f32 %v2050, %v2207
      %v2209 = vpop.f32.mrb[0].mxu0
      %v2210 = vpop.f32.mrb[0].mxu0
      %v2211 = vadd.f32 %v2055, %v2210
      %v2212 = vpop.f32.mrb[0].mxu0
      %2213 = vmatprep.mubr.bf16.mxu0 0
      %2214 = vmatmul.mubr.bf16.gmra.mrb[0].mxu0 %v2151
      %v2215 = vpop.f32.mrb[0].mxu0
      %v2216 = vadd.f32 %v2060, %v2215
      %v2217 = vpop.f32.mrb[0].mxu0
      %v2218 = vpop.f32.mrb[0].mxu0
      %v2219 = vadd.f32 %v2065, %v2218
      %v2220 = vpop.f32.mrb[0].mxu0
      %2221 = vmatprep.mubr.bf16.mxu0 0
      %2222 = vmatmul.mubr.bf16.gmra.mrb[0].mxu0 %v2152
      %v2223 = vpop.f32.mrb[0].mxu0
      %v2224 = vadd.f32 %v2070, %v2223
      %v2225 = vpop.f32.mrb[0].mxu0
      %v2226 = vpop.f32.mrb[0].mxu0
      %v2227 = vadd.f32 %v2075, %v2226
      %v2228 = vpop.f32.mrb[0].mxu0
      %2229 = vmatprep.mubr.bf16.mxu0 0
      %2230 = vmatmul.mubr.bf16.gmra.mrb[0].mxu0 %v2153
      %v2231 = vpop.f32.mrb[0].mxu0
      %v2232 = vadd.f32 %v2080, %v2231
      %v2233 = vpop.f32.mrb[0].mxu0
      %v2234 = vpop.f32.mrb[0].mxu0
      %v2235 = vadd.f32 %v2085, %v2234
      %v2236 = vpop.f32.mrb[0].mxu0
      %2237 = vmatprep.mubr.bf16.mxu0 0
      %2238 = vmatmul.mubr.bf16.gmra.mrb[0].mxu0 %v2154
      %v2239 = vpop.f32.mrb[0].mxu0
      %v2240 = vadd.f32 %v2090, %v2239
      %v2241 = vpop.f32.mrb[0].mxu0
      %v2242 = vpop.f32.mrb[0].mxu0
      %v2243 = vadd.f32 %v2095, %v2242
      %v2244 = vpop.f32.mrb[0].mxu0
      %2245 = vmatprep.mubr.bf16.mxu0 0
      %2246 = vmatmul.mubr.bf16.gmra.mrb[0].mxu0 %v2155
      %v2247 = vpop.f32.mrb[0].mxu0
      %v2248 = vadd.f32 %v2100, %v2247
      %v2249 = vpop.f32.mrb[0].mxu0
      %v2250 = vpop.f32.mrb[0].mxu0
      %v2251 = vadd.f32 %v2105, %v2250
      %v2252 = vpop.f32.mrb[0].mxu0
      %2253 = vmatprep.mubr.bf16.mxu0 0
      %2254 = vmatmul.mubr.bf16.gmra.mrb[0].mxu0 %v2156
      %v2255 = vpop.f32.mrb[0].mxu0
      %v2256 = vadd.f32 %v2110, %v2255
      %v2257 = vpop.f32.mrb[0].mxu0
      %v2258 = vpop.f32.mrb[0].mxu0
      %v2259 = vadd.f32 %v2115, %v2258
      %v2260 = vpop.f32.mrb[0].mxu0
      %2261 = vdwg.mxu0
      %v2262 = vmax.f32 %v2200, 0.0
      %v2263 = vmax.f32 %v2203, 0.0
      %v2264 = vmax.f32 %v2208, 0.0
      %v2265 = vmax.f32 %v2211, 0.0
      %v2266 = vmax.f32 %v2216, 0.0
      %v2267 = vmax.f32 %v2219, 0.0
      %v2268 = vmax.f32 %v2224, 0.0
      %v2269 = vmax.f32 %v2227, 0.0
      %v2270 = vmax.f32 %v2232, 0.0
      %v2271 = vmax.f32 %v2235, 0.0
      %v2272 = vmax.f32 %v2240, 0.0
      %v2273 = vmax.f32 %v2243, 0.0
      %v2274 = vmax.f32 %v2248, 0.0
      %v2275 = vmax.f32 %v2251, 0.0
      %v2276 = vmax.f32 %v2256, 0.0
      %v2277 = vmax.f32 %v2259, 0.0
      %v2278 = vld [vmem:[%s5] sm:$0xff]
      %v2279 = vld [vmem:[%s6] sm:$0xff]
      %2281 = vset.pattern.permute.xlu0 0
      %2282 = vperm.xlu0 %2281, %v2279
      %v2283 = vpop.permute.xlu0 %2282
      %2285 = vmatprep.subr.mxu0 0.0
      %2286 = vmatpush1.msra.mxu0 %v2262
      %2287 = vmatprep.subr.mxu0 0.0
      %2288 = vmatpush1.msra.mxu0 %v2263
      %2289 = vmatprep.subr.mxu0 0.0
      %2290 = vmatpush1.msra.mxu0 %v2264
      %2291 = vmatprep.subr.mxu0 0.0
      %2292 = vmatpush1.msra.mxu0 %v2265
      %2293 = vmatprep.subr.mxu0 0.0
      %2294 = vmatpush1.msra.mxu0 %v2266
      %2295 = vmatprep.subr.mxu0 0.0
      %2296 = vmatpush1.msra.mxu0 %v2267
      %2297 = vmatprep.subr.mxu0 0.0
      %2298 = vmatpush1.msra.mxu0 %v2268
      %2299 = vmatprep.subr.mxu0 0.0
      %2300 = vmatpush1.msra.mxu0 %v2269
      %2301 = vmatprep.subr.mxu0 0.0
      %2302 = vmatpush1.msra.mxu0 %v2270
      %2303 = vmatprep.subr.mxu0 0.0
      %2304 = vmatpush1.msra.mxu0 %v2271
      %2305 = vmatprep.subr.mxu0 0.0
      %2306 = vmatpush1.msra.mxu0 %v2272
      %2307 = vmatprep.subr.mxu0 0.0
      %2308 = vmatpush1.msra.mxu0 %v2273
      %2309 = vmatprep.subr.mxu0 0.0
      %2310 = vmatpush1.msra.mxu0 %v2274
      %2311 = vmatprep.subr.mxu0 0.0
      %2312 = vmatpush1.msra.mxu0 %v2275
      %2313 = vmatprep.subr.mxu0 0.0
      %2314 = vmatpush1.msra.mxu0 %v2276
      %2315 = vmatprep.subr.mxu0 0.0
      %2316 = vmatpush1.msra.mxu0 %v2277
      %2317 = vmatprep.subr.mxu0 0.0
      %2318 = vmatpush1.msra.mxu0 0.0
      %2319 = vmatprep.subr.mxu0 0.0
      %2320 = vmatpush1.msra.mxu0 0.0
      %2321 = vmatprep.subr.mxu0 0.0
      %2322 = vmatpush1.msra.mxu0 0.0
      %2323 = vmatprep.subr.mxu0 0.0
      %2324 = vmatpush1.msra.mxu0 0.0
      %2325 = vmatprep.subr.mxu0 0.0
      %2326 = vmatpush1.msra.mxu0 0.0
      %2327 = vmatprep.subr.mxu0 0.0
      %2328 = vmatpush1.msra.mxu0 0.0
      %2329 = vmatprep.subr.mxu0 0.0
      %2330 = vmatpush1.msra.mxu0 0.0
      %2331 = vmatprep.subr.mxu0 0.0
      %2332 = vmatpush1.msra.mxu0 0.0
      %2333 = vmatprep.subr.mxu0 0.0
      %2334 = vmatpush1.msra.mxu0 0.0
      %2335 = vmatprep.subr.mxu0 0.0
      %2336 = vmatpush1.msra.mxu0 0.0
      %2337 = vmatprep.subr.mxu0 0.0
      %2338 = vmatpush1.msra.mxu0 0.0
      %2339 = vmatprep.subr.mxu0 0.0
      %2340 = vmatpush1.msra.mxu0 0.0
      %2341 = vmatprep.subr.mxu0 0.0
      %2342 = vmatpush1.msra.mxu0 0.0
      %2343 = vmatprep.subr.mxu0 0.0
      %2344 = vmatpush1.msra.mxu0 0.0
      %2345 = vmatprep.subr.mxu0 0.0
      %2346 = vmatpush1.msra.mxu0 0.0
      %2347 = vmatprep.subr.mxu0 0.0
      %2348 = vmatpush1.msra.mxu0 0.0
      %2349 = vmatprep.mubr.f32.mxu0 0.0
      %2350 = vmatmul.mubr.f32.gmra.mrb[0].mxu0 %v2278
      %v2351 = vpop.f32.mrb[0].mxu0
      %v2352 = vadd.f32 %v2283, %v2351
      %v2353 = vpop.f32.mrb[0].mxu0
      %2354 = vdwg.mxu0
      %2355 = vst [vmem:[%s273] sm:$0xff] %v2352
      %p2356 = scmp.lt.s32.totalorder %s18, 1
      %s2357 = scalar_select %p2356, %s18, 1
      %s2358 = smul.addr %s2357, 8
      %s2359 = scalar_lea.vmem %s7, %s2358
      // Predicated region
      $region49: #{dqnet_forward.1} parent=47 // pred_check
        %p2360 = pneg %p188
      $region50: #{dqnet_forward.1} parent=47 // pred_check_branch
        %2362 = sbr.rel (%p2360) target = $region52
      $region51: #{dqnet_forward.1} parent=47 // pred_region
        _
      $region52: #{dqnet_forward.1} parent=47 // pred_fallthru
        _
    $region48: #{dqnet_forward.1} parent=5 // pred_fallthru
      _
    %p2363 = scmp.le.s32.totalorder 2, %s13
    // Predicated region
    $region53: #{dqnet_forward.1} parent=5 // pred_check
      %p2364 = pneg %p2363
    $region54: #{dqnet_forward.1} parent=5 // pred_check_branch
      %2366 = sbr.rel (%p2364) target = $region56
    $region55: #{dqnet_forward.1} parent=5 // pred_region
      %s2367 = ssub.s32 %s13, 2
      // Predicated region
      $region57: #{dqnet_forward.1} parent=55 // pred_check
        %p2368 = pneg %p194
      $region58: #{dqnet_forward.1} parent=55 // pred_check_branch
        %2370 = sbr.rel (%p2368) target = $region60
      $region59: #{dqnet_forward.1} parent=55 // pred_region
        %p2371 = scmp.lt.s32.totalorder %s19, 1
        %s2372 = scalar_select %p2371, %s19, 1
        %s2373 = smul.addr %s2372, 8
        %s2374 = scalar_lea.vmem %s7, %s2373
      $region60: #{dqnet_forward.1} parent=55 // pred_fallthru
        _
    $region56: #{dqnet_forward.1} parent=5 // pred_fallthru
      _
  $region6: #{dqnet_forward.1} parent=0 // loop_footer
    %s17 = sadd.s32 1, %s13
  $region7: #{dqnet_forward.1} parent=0 // loop_footer_branch
    %12 = sbr.rel target = $region3
  $region8: #{dqnet_forward.1} parent=0 // loop_exit
    _

</llo_original>
